<compile_context>
chip_gen: v7x
topology: tpu7x:2x2x1
jax: 0.10.0
libtpu: 0.0.40
codegen_flags: <defaults>
</compile_context>

<pallas_src>
import math

import numpy as np
import jax
import jax.numpy as jnp
from jax.experimental import pallas as pl
from jax.experimental.pallas import tpu as pltpu


# ---------------------------------------------------------------------------
# Fused kernel.  Grid = (N, Hout // TH); batch is "parallel", H-tile axis is
# "arbitrary" (scratch + resident segf output persist across it).
#   p_ref:   (1, Rs, Cin*64) bf16   patch panel of one sample (Rs = H8*W8)
#   ws_ref:  (Cin*64, D) bf16       stem weights     bs_ref: (1, D) f32
#   wg_ref:  (C, D) bf16            seg 1x1 weights  bg_ref: (C, 1) f32
#   uh_ref:  (TH, H8) bf16          row tile of the bilinear Uh matrix
#   uwT_ref: (W8, Wout) bf16        bilinear Uw^T matrix
#   logy_ref:(1, C, TH, Wout) bf16  seg log-probs (NCHW row tile)
#   segf_ref:(1, C, Rs) f32         raw seg map (NCHW-flat, written at h==0)
#   sT_ref:  (H8, C*W8) bf16        persistent scratch: seg map relayout
# ---------------------------------------------------------------------------
def _drnseg_kernel(p_ref, ws_ref, bs_ref, wg_ref, bg_ref, uh_ref, uwT_ref,
                   logy_ref, segf_ref, sT_ref):
    TH, H8 = uh_ref.shape
    W8, Wout = uwT_ref.shape
    C = wg_ref.shape[0]

    # ---- once per sample: stem + seg 1x1 + relayout into scratch -----------
    @pl.when(pl.program_id(1) == 0)
    def _():
        # base stem: stride-8 patchify conv as a bf16 MXU matmul + ReLU
        h = jnp.dot(p_ref[0], ws_ref[...],
                    preferred_element_type=jnp.float32)       # (Rs, D) f32
        h = jnp.maximum(h + bs_ref[...], 0.0)
        hb = h.astype(jnp.bfloat16)

        # seg 1x1 conv, channel-major ('cd,rd->cr'), bf16 in / f32 accum
        s_cr = jax.lax.dot_general(
            wg_ref[...], hb, (((1,), (1,)), ((), ())),
            preferred_element_type=jnp.float32) + bg_ref[...]  # (C, Rs) f32
        segf_ref[0] = s_cr                                      # 2nd output

        # relayout seg map once (small: C*Rs elems) into (H8, C*W8) so every
        # H-tile's Uh contraction is a single dense 2-D matmul.
        s3 = s_cr.reshape(C, H8, W8)
        sT_ref[...] = (s3.transpose(1, 0, 2)
                         .reshape(H8, C * W8)
                         .astype(jnp.bfloat16))

    # ---- per H-tile: bilinear x8 upsample (Uh first, then Uw) --------------
    # bt[t, c*W8+j] = sum_i Uh_tile[t,i] * s[c,i,j]
    bt = jnp.dot(uh_ref[...], sT_ref[...],
                 preferred_element_type=jnp.float32)            # (TH, C*W8) f32
    # small relayout (W8-sized, 8x smaller than the output tile):
    b = bt.reshape(TH, C, W8).transpose(1, 0, 2).reshape(C * TH, W8)
    # one wide MXU matmul; result is already laid out as (C, TH, Wout) = NCHW
    y = jnp.dot(b.astype(jnp.bfloat16), uwT_ref[...],
                preferred_element_type=jnp.float32)             # (C*TH, Wout)
    y = y.reshape(C, TH, Wout)

    # ---- channel-wise log-softmax (nn.LogSoftmax on 4D -> dim=1) in f32,
    # single lane-dense bf16 store of the output tile -------------------------
    m = jnp.max(y, axis=0, keepdims=True)
    z = y - m
    lse = jnp.log(jnp.sum(jnp.exp(z), axis=0, keepdims=True))
    logy_ref[0] = (z - lse).astype(logy_ref.dtype)


# ---------------------------------------------------------------------------
# Glue: bilinear taps / upsample matrices / parameter packing.
# ---------------------------------------------------------------------------
def bilinear_1d_taps():
    # fill_up_weights: f = ceil(16/2) = 8, c = (2f-1-f%2)/(2f) = 15/16; separable.
    f = 8.0
    c = 15.0 / 16.0
    k = jnp.arange(16, dtype=jnp.float32)
    return 1.0 - jnp.abs(k / f - c)        # multiples of 1/16 -> exact in bf16


def make_upsample_matrix(n_in):
    # ConvTranspose2d(k=16, stride=8, pad=4):  U[o, i] = w1d[o + 4 - 8*i]
    k, s, p = 16, 8, 4
    w1d = bilinear_1d_taps()
    n_out = n_in * s
    oh = jnp.arange(n_out)[:, None]
    ih = jnp.arange(n_in)[None, :]
    idx = oh + p - s * ih
    valid = (idx >= 0) & (idx < k)
    return jnp.where(valid, w1d[jnp.clip(idx, 0, k - 1)], 0.0).astype(jnp.float32)


def _pick_th(hout, max_th):
    """Largest output-row tile that divides Hout, is a multiple of 8, <= max_th."""
    max_th = max(8, max_th)
    if hout <= max_th:
        return hout
    best = 8
    for t in range(8, max_th + 1, 8):
        if hout % t == 0:
            best = t
    return best


def _vmem_limit_bytes():
    # ~96 MiB on 128-MiB-VMEM parts (v5e/v6e), ~48 MiB on v7x (64 MiB physical).
    cap = 128 << 20
    try:
        cap = int(getattr(pltpu.get_tpu_info(), "vmem_capacity_bytes", cap))
    except Exception:
        pass
    return int(min(100 << 20, cap * 3 // 4))


def drn_seg_forward(x, w_stem, b_stem, w_seg, b_seg, *, max_th=128,
                    logits_dtype=jnp.bfloat16):
    """Returns (log_softmax(up(seg(base(x)))), seg(base(x))), NCHW.

    Log-probs are emitted in bf16 (feedback: output-writeback bound); pass
    logits_dtype=jnp.float32 for a bit-heavier, higher-precision output.
    """
    N, Cin, H, W = x.shape
    D = w_stem.shape[0]
    C = w_seg.shape[0]
    assert H % 8 == 0 and W % 8 == 0
    H8, W8 = H // 8, W // 8
    Rs = H8 * W8
    K = Cin * 64
    TH = _pick_th(H, max_th)
    nH = H // TH

    # patchify (stride-8 / kernel-8 conv as matmul) -- one fused XLA relayout+cast
    patches = (
        x.reshape(N, Cin, H8, 8, W8, 8)
        .transpose(0, 2, 4, 1, 3, 5)
        .reshape(N, Rs, K)
        .astype(jnp.bfloat16)
    )
    ws = w_stem.reshape(D, K).T.astype(jnp.bfloat16)          # (K, D)
    wg = w_seg.reshape(C, D).astype(jnp.bfloat16)             # (C, D)
    bs = b_stem.reshape(1, D).astype(jnp.float32)
    bg = b_seg.reshape(C, 1).astype(jnp.float32)
    uh = make_upsample_matrix(H8).astype(jnp.bfloat16)        # (Hout, H8), exact
    uwT = make_upsample_matrix(W8).T.astype(jnp.bfloat16)     # (W8, Wout), exact

    out_itemsize = np.dtype(logits_dtype).itemsize
    flops = 2 * N * (Rs * K * D              # stem
                     + C * Rs * D            # seg 1x1
                     + C * H * H8 * W8       # Uh contraction
                     + C * H * W * W8)       # Uw contraction
    transcendentals = N * (C + 1) * H * W    # exp + log of the log-softmax
    bytes_accessed = (N * Rs * K * 2 + K * D * 2 + C * D * 2 + D * 4 + C * 4
                      + H * H8 * 2 + W8 * W * 2
                      + N * C * H * W * out_itemsize + N * C * Rs * 4)

    logy, seg_flat = pl.pallas_call(
        _drnseg_kernel,
        out_shape=(
            jax.ShapeDtypeStruct((N, C, H, W), logits_dtype),
            jax.ShapeDtypeStruct((N, C, Rs), jnp.float32),
        ),
        grid=(N, nH),
        in_specs=[
            pl.BlockSpec((1, Rs, K), lambda n, h: (n, 0, 0)),  # per-sample patches
            pl.BlockSpec((K, D), lambda n, h: (0, 0)),         # weights resident
            pl.BlockSpec((1, D), lambda n, h: (0, 0)),
            pl.BlockSpec((C, D), lambda n, h: (0, 0)),
            pl.BlockSpec((C, 1), lambda n, h: (0, 0)),
            pl.BlockSpec((TH, H8), lambda n, h: (h, 0)),       # Uh row tile
            pl.BlockSpec((W8, W), lambda n, h: (0, 0)),
        ],
        out_specs=(
            pl.BlockSpec((1, C, TH, W), lambda n, h: (n, 0, h, 0)),
            pl.BlockSpec((1, C, Rs), lambda n, h: (n, 0, 0)),  # resident across h
        ),
        scratch_shapes=[pltpu.VMEM((H8, C * W8), jnp.bfloat16)],
        compiler_params=pltpu.CompilerParams(
            dimension_semantics=("parallel", "arbitrary"),
            vmem_limit_bytes=_vmem_limit_bytes(),
        ),
        cost_estimate=pl.CostEstimate(
            flops=flops, transcendentals=transcendentals,
            bytes_accessed=bytes_accessed),
    )(patches, ws, bs, wg, bg, uh, uwT)

    x_seg = seg_flat.reshape(N, C, H8, W8)                    # contiguous -> free
    return logy, x_seg


# ---------------------------------------------------------------------------
# Pure-JAX reference (independent path via lax convs) for correctness check.
# Uses the same bf16-operand / f32-accumulate numerics as the kernel so the
# comparison is apples-to-apples; layout/indexing bugs still show as O(1).
# ---------------------------------------------------------------------------
def reference_forward(x, w_stem, b_stem, w_seg, b_seg):
    dn = ("NCHW", "OIHW", "NCHW")
    C = w_seg.shape[0]
    h = jax.lax.conv_general_dilated(
        x.astype(jnp.bfloat16), w_stem.astype(jnp.bfloat16), (8, 8), "VALID",
        dimension_numbers=dn, preferred_element_type=jnp.float32)
    h = jax.nn.relu(h + b_stem.reshape(1, -1, 1, 1))
    s = jax.lax.conv_general_dilated(
        h.astype(jnp.bfloat16), w_seg.astype(jnp.bfloat16), (1, 1), "VALID",
        dimension_numbers=dn, preferred_element_type=jnp.float32)
    s = s + b_seg.reshape(1, -1, 1, 1)
    w1d = bilinear_1d_taps()
    w2d = w1d[:, None] * w1d[None, :]                         # symmetric -> no flip
    w_up = jnp.broadcast_to(w2d, (C, 1, 16, 16))
    y = jax.lax.conv_general_dilated(
        s.astype(jnp.bfloat16), w_up.astype(jnp.bfloat16),
        window_strides=(1, 1), padding=((11, 11), (11, 11)),
        lhs_dilation=(8, 8), dimension_numbers=dn, feature_group_count=C,
        preferred_element_type=jnp.float32)
    return jax.nn.log_softmax(y, axis=1), s


if __name__ == "__main__":
    key = jax.random.PRNGKey(0)
    N, Cin, H, W = 2, 3, 32, 32
    out_dim, classes = 32, 5

    k_x, k_stem, k_bias, k_seg = jax.random.split(key, 4)
    x = jax.random.normal(k_x, (N, Cin, H, W), jnp.float32)

    # synthetic "base" stem params (deterministic)
    w_stem = jax.random.normal(k_stem, (out_dim, Cin, 8, 8), jnp.float32) * math.sqrt(
        2.0 / (Cin * 64))
    b_stem = 0.1 * jax.random.normal(k_bias, (out_dim,), jnp.float32)
    # seg conv init as in DRNSeg.__init__: normal(0, sqrt(2/(kh*kw*out_ch))), bias 0
    w_seg = jax.random.normal(k_seg, (classes, out_dim, 1, 1), jnp.float32) * math.sqrt(
        2.0 / classes)
    b_seg = jnp.zeros((classes,), jnp.float32)

    fwd = jax.jit(drn_seg_forward, static_argnames=("max_th",))
    # max_th=16 -> 2 H-tiles per sample at H=32: exercises the tiled grid axis
    # and the persistent seg-map scratch path.
    logy, x_seg = fwd(x, w_stem, b_stem, w_seg, b_seg, max_th=16)
    jax.block_until_ready((logy, x_seg))

    ref_logy, ref_seg = reference_forward(x, w_stem, b_stem, w_seg, b_seg)
    np.testing.assert_allclose(np.asarray(x_seg), np.asarray(ref_seg),
                               rtol=2e-2, atol=5e-2)
    np.testing.assert_allclose(np.asarray(logy.astype(jnp.float32)),
                               np.asarray(ref_logy), rtol=2e-2, atol=5e-2)

    assert logy.shape == (N, classes, H, W)
    assert x_seg.shape == (N, classes, H // 8, W // 8)
    print("KERNEL_OK")
</pallas_src>

<mosaic_0001>
module attributes {stable_mosaic.version = 11 : i64} {
  func.func @_drnseg_kernel(%arg0: i32, %arg1: i32, %arg2: memref<1x16x192xbf16, #tpu.memory_space<vmem>>, %arg3: memref<192x32xbf16, #tpu.memory_space<vmem>>, %arg4: memref<1x32xf32, #tpu.memory_space<vmem>>, %arg5: memref<5x32xbf16, #tpu.memory_space<vmem>>, %arg6: memref<5x1xf32, #tpu.memory_space<vmem>>, %arg7: memref<16x4xbf16, #tpu.memory_space<vmem>>, %arg8: memref<4x32xbf16, #tpu.memory_space<vmem>>, %arg9: memref<1x5x16x32xbf16, #tpu.memory_space<vmem>>, %arg10: memref<1x5x16xf32, #tpu.memory_space<vmem>>, %arg11: memref<4x20xbf16, #tpu.memory_space<vmem>>) attributes {dimension_semantics = [#tpu.dimension_semantics<parallel>, #tpu.dimension_semantics<arbitrary>], iteration_bounds = array<i64: 2, 2>, scalar_prefetch = 0 : i64, scratch_operands = 1 : i64, tpu.core_type = #tpu.core_type<tc>, window_params = [{transform_indices = @transform_0, window_bounds = array<i64: 1, 16, 192>}, {pipeline_mode = #tpu.pipeline_mode<synchronous>, transform_indices = @transform_1, window_bounds = array<i64: 192, 32>}, {pipeline_mode = #tpu.pipeline_mode<synchronous>, transform_indices = @transform_2, window_bounds = array<i64: 1, 32>}, {pipeline_mode = #tpu.pipeline_mode<synchronous>, transform_indices = @transform_3, window_bounds = array<i64: 5, 32>}, {pipeline_mode = #tpu.pipeline_mode<synchronous>, transform_indices = @transform_4, window_bounds = array<i64: 5, 1>}, {transform_indices = @transform_5, window_bounds = array<i64: 16, 4>}, {pipeline_mode = #tpu.pipeline_mode<synchronous>, transform_indices = @transform_6, window_bounds = array<i64: 4, 32>}, {transform_indices = @transform_7, window_bounds = array<i64: 1, 5, 16, 32>}, {transform_indices = @transform_8, window_bounds = array<i64: 1, 5, 16>}]} {
    %c0_i32 = arith.constant 0 : i32
    %0 = arith.cmpi eq, %arg1, %c0_i32 : i32
    %1 = arith.extui %0 : i1 to i32
    %c0_i32_0 = arith.constant 0 : i32
    %2 = arith.cmpi ne, %1, %c0_i32_0 : i32
    scf.if %2 {
      %c0_13 = arith.constant 0 : index
      %c0_14 = arith.constant 0 : index
      %c0_15 = arith.constant 0 : index
      %27 = vector.load %arg2[%c0_13, %c0_14, %c0_15] : memref<1x16x192xbf16, #tpu.memory_space<vmem>>, vector<1x16x192xbf16>
      %28 = vector.shape_cast %27 : vector<1x16x192xbf16> to vector<16x192xbf16>
      %c0_16 = arith.constant 0 : index
      %c0_17 = arith.constant 0 : index
      %29 = vector.load %arg3[%c0_16, %c0_17] : memref<192x32xbf16, #tpu.memory_space<vmem>>, vector<192x32xbf16>
      %cst_18 = arith.constant dense<0.000000e+00> : vector<16x32xf32>
      %30 = tpu.matmul %28, %29, %cst_18 {dimension_numbers = #tpu.dot_dimension_numbers<[1], [0], [0], [1], [0, 0, 1, 1], [], []>} : vector<16x192xbf16>, vector<192x32xbf16>, vector<16x32xf32> -> vector<16x32xf32>
      %c0_19 = arith.constant 0 : index
      %c0_20 = arith.constant 0 : index
      %31 = vector.load %arg4[%c0_19, %c0_20] : memref<1x32xf32, #tpu.memory_space<vmem>>, vector<1x32xf32>
      %32 = vector.broadcast %31 : vector<1x32xf32> to vector<16x32xf32>
      %33 = arith.addf %30, %32 : vector<16x32xf32>
      %cst_21 = arith.constant 0.000000e+00 : f32
      %34 = vector.broadcast %cst_21 : f32 to vector<16x32xf32>
      %35 = arith.maximumf %33, %34 : vector<16x32xf32>
      %36 = arith.truncf %35 : vector<16x32xf32> to vector<16x32xbf16>
      %c0_22 = arith.constant 0 : index
      %c0_23 = arith.constant 0 : index
      %37 = vector.load %arg5[%c0_22, %c0_23] : memref<5x32xbf16, #tpu.memory_space<vmem>>, vector<5x32xbf16>
      %cst_24 = arith.constant dense<0.000000e+00> : vector<5x16xf32>
      %38 = tpu.matmul %37, %36, %cst_24 {dimension_numbers = #tpu.dot_dimension_numbers<[1], [1], [0], [0], [0, 0, 1, 0], [], []>} : vector<5x32xbf16>, vector<16x32xbf16>, vector<5x16xf32> -> vector<5x16xf32>
      %c0_25 = arith.constant 0 : index
      %c0_26 = arith.constant 0 : index
      %39 = vector.load %arg6[%c0_25, %c0_26] : memref<5x1xf32, #tpu.memory_space<vmem>>, vector<5x1xf32>
      %40 = vector.broadcast %39 : vector<5x1xf32> to vector<5x16xf32>
      %41 = arith.addf %38, %40 : vector<5x16xf32>
      %c0_27 = arith.constant 0 : index
      %c0_28 = arith.constant 0 : index
      %c0_29 = arith.constant 0 : index
      %42 = vector.load %arg10[%c0_27, %c0_28, %c0_29] : memref<1x5x16xf32, #tpu.memory_space<vmem>>, vector<1x5x16xf32>
      %43 = vector.shape_cast %42 : vector<1x5x16xf32> to vector<5x16xf32>
      %44 = vector.shape_cast %41 : vector<5x16xf32> to vector<1x5x16xf32>
      tpu.vector_store %arg10[%c0_27, %c0_28, %c0_29], %44 {strides = array<i32>} : memref<1x5x16xf32, #tpu.memory_space<vmem>>, vector<1x5x16xf32>,
      %45 = vector.shape_cast %41 : vector<5x16xf32> to vector<5x4x4xf32>
      %46 = tpu.transpose %45, [1, 0, 2] : vector<5x4x4xf32> -> vector<4x5x4xf32>
      %47 = vector.shape_cast %46 : vector<4x5x4xf32> to vector<4x20xf32>
      %48 = arith.truncf %47 : vector<4x20xf32> to vector<4x20xbf16>
      %c0_30 = arith.constant 0 : index
      %c0_31 = arith.constant 0 : index
      %49 = vector.load %arg11[%c0_30, %c0_31] : memref<4x20xbf16, #tpu.memory_space<vmem>>, vector<4x20xbf16>
      tpu.vector_store %arg11[%c0_30, %c0_31], %48 {strides = array<i32>} : memref<4x20xbf16, #tpu.memory_space<vmem>>, vector<4x20xbf16>,
    } else {
    }
    %c0 = arith.constant 0 : index
    %c0_1 = arith.constant 0 : index
    %3 = vector.load %arg7[%c0, %c0_1] : memref<16x4xbf16, #tpu.memory_space<vmem>>, vector<16x4xbf16>
    %c0_2 = arith.constant 0 : index
    %c0_3 = arith.constant 0 : index
    %4 = vector.load %arg11[%c0_2, %c0_3] : memref<4x20xbf16, #tpu.memory_space<vmem>>, vector<4x20xbf16>
    %cst = arith.constant dense<0.000000e+00> : vector<16x20xf32>
    %5 = tpu.matmul %3, %4, %cst {dimension_numbers = #tpu.dot_dimension_numbers<[1], [0], [0], [1], [0, 0, 1, 1], [], []>} : vector<16x4xbf16>, vector<4x20xbf16>, vector<16x20xf32> -> vector<16x20xf32>
    %6 = vector.shape_cast %5 : vector<16x20xf32> to vector<16x5x4xf32>
    %7 = tpu.transpose %6, [1, 0, 2] : vector<16x5x4xf32> -> vector<5x16x4xf32>
    %8 = vector.shape_cast %7 : vector<5x16x4xf32> to vector<80x4xf32>
    %9 = arith.truncf %8 : vector<80x4xf32> to vector<80x4xbf16>
    %c0_4 = arith.constant 0 : index
    %c0_5 = arith.constant 0 : index
    %10 = vector.load %arg8[%c0_4, %c0_5] : memref<4x32xbf16, #tpu.memory_space<vmem>>, vector<4x32xbf16>
    %cst_6 = arith.constant dense<0.000000e+00> : vector<80x32xf32>
    %11 = tpu.matmul %9, %10, %cst_6 {dimension_numbers = #tpu.dot_dimension_numbers<[1], [0], [0], [1], [0, 0, 1, 1], [], []>} : vector<80x4xbf16>, vector<4x32xbf16>, vector<80x32xf32> -> vector<80x32xf32>
    %12 = vector.shape_cast %11 : vector<80x32xf32> to vector<5x16x32xf32>
    %cst_7 = arith.constant dense<0xFF800000> : vector<16x32xf32>
    %13 = vector.multi_reduction <maximumf>, %12, %cst_7 [0] : vector<5x16x32xf32> to vector<16x32xf32>
    %14 = vector.shape_cast %13 : vector<16x32xf32> to vector<1x16x32xf32>
    %15 = vector.broadcast %14 : vector<1x16x32xf32> to vector<5x16x32xf32>
    %16 = arith.subf %12, %15 : vector<5x16x32xf32>
    %17 = math.exp %16 : vector<5x16x32xf32>
    %cst_8 = arith.constant dense<0.000000e+00> : vector<16x32xf32>
    %18 = vector.multi_reduction <add>, %17, %cst_8 [0] : vector<5x16x32xf32> to vector<16x32xf32>
    %19 = vector.shape_cast %18 : vector<16x32xf32> to vector<1x16x32xf32>
    %20 = math.log %19 : vector<1x16x32xf32>
    %21 = vector.broadcast %20 : vector<1x16x32xf32> to vector<5x16x32xf32>
    %22 = arith.subf %16, %21 : vector<5x16x32xf32>
    %23 = arith.truncf %22 : vector<5x16x32xf32> to vector<5x16x32xbf16>
    %c0_9 = arith.constant 0 : index
    %c0_10 = arith.constant 0 : index
    %c0_11 = arith.constant 0 : index
    %c0_12 = arith.constant 0 : index
    %24 = vector.load %arg9[%c0_9, %c0_10, %c0_11, %c0_12] : memref<1x5x16x32xbf16, #tpu.memory_space<vmem>>, vector<1x5x16x32xbf16>
    %25 = vector.shape_cast %24 : vector<1x5x16x32xbf16> to vector<5x16x32xbf16>
    %26 = vector.shape_cast %23 : vector<5x16x32xbf16> to vector<1x5x16x32xbf16>
    tpu.vector_store %arg9[%c0_9, %c0_10, %c0_11, %c0_12], %26 {strides = array<i32>} : memref<1x5x16x32xbf16, #tpu.memory_space<vmem>>, vector<1x5x16x32xbf16>,
    return
  }
  func.func @transform_0(%arg0: i32, %arg1: i32) -> (i32, i32, i32) {
    %c0_i32 = arith.constant 0 : i32
    %c0_i32_0 = arith.constant 0 : i32
    %c0_i32_1 = arith.constant 0 : i32
    return %arg0, %c0_i32, %c0_i32_0 : i32, i32, i32
  }
  func.func @transform_1(%arg0: i32, %arg1: i32) -> (i32, i32) {
    %c0_i32 = arith.constant 0 : i32
    %c0_i32_0 = arith.constant 0 : i32
    %c0_i32_1 = arith.constant 0 : i32
    return %c0_i32, %c0_i32_0 : i32, i32
  }
  func.func @transform_2(%arg0: i32, %arg1: i32) -> (i32, i32) {
    %c0_i32 = arith.constant 0 : i32
    %c0_i32_0 = arith.constant 0 : i32
    %c0_i32_1 = arith.constant 0 : i32
    return %c0_i32, %c0_i32_0 : i32, i32
  }
  func.func @transform_3(%arg0: i32, %arg1: i32) -> (i32, i32) {
    %c0_i32 = arith.constant 0 : i32
    %c0_i32_0 = arith.constant 0 : i32
    %c0_i32_1 = arith.constant 0 : i32
    return %c0_i32, %c0_i32_0 : i32, i32
  }
  func.func @transform_4(%arg0: i32, %arg1: i32) -> (i32, i32) {
    %c0_i32 = arith.constant 0 : i32
    %c0_i32_0 = arith.constant 0 : i32
    %c0_i32_1 = arith.constant 0 : i32
    return %c0_i32, %c0_i32_0 : i32, i32
  }
  func.func @transform_5(%arg0: i32, %arg1: i32) -> (i32, i32) {
    %c0_i32 = arith.constant 0 : i32
    %c0_i32_0 = arith.constant 0 : i32
    return %arg1, %c0_i32 : i32, i32
  }
  func.func @transform_6(%arg0: i32, %arg1: i32) -> (i32, i32) {
    %c0_i32 = arith.constant 0 : i32
    %c0_i32_0 = arith.constant 0 : i32
    %c0_i32_1 = arith.constant 0 : i32
    return %c0_i32, %c0_i32_0 : i32, i32
  }
  func.func @transform_7(%arg0: i32, %arg1: i32) -> (i32, i32, i32, i32) {
    %c0_i32 = arith.constant 0 : i32
    %c0_i32_0 = arith.constant 0 : i32
    %c0_i32_1 = arith.constant 0 : i32
    return %arg0, %c0_i32, %arg1, %c0_i32_0 : i32, i32, i32, i32
  }
  func.func @transform_8(%arg0: i32, %arg1: i32) -> (i32, i32, i32) {
    %c0_i32 = arith.constant 0 : i32
    %c0_i32_0 = arith.constant 0 : i32
    %c0_i32_1 = arith.constant 0 : i32
    return %arg0, %c0_i32, %c0_i32_0 : i32, i32, i32
  }
}

</mosaic_0001>

<llo_original>
// kernel: drn_seg_forward.1
$region0: #{drn_seg_forward.1}
  #allocation0 [shape = 'u32[]', space=smem, size = 0x4, offset = 0x4, fixed_abs, tag = 'smem constant byte address 0x4 - core index']
  #allocation1 [shape = 'u32[144,128]{1,0:T(1,128)}', space=vmem, size = 0x12000, scoped, tag = 'internal scratch']
  #allocation2 [shape = 'bf16[4,20]{1,0:T(4,128)(2,1)}', space=vmem, size = 0x400, scoped, tag = 'scratch operand']
  #allocation18 [shape = 's32[]', space=sflag, size = 0x4, offset = 0, fixed_abs, tag = 'sflag constant byte address 0x0 - dummy sync flag']
  %s0 = inlined_call_operand.hbm [shape: bf16[2,16,192], index: 0, kind: input, shape index: {}]
  %s1 = inlined_call_operand.hbm [shape: bf16[192,32], index: 1, kind: input, shape index: {}]
  %s2 = inlined_call_operand.hbm [shape: f32[1,32], index: 2, kind: input, shape index: {}]
  %s3 = inlined_call_operand.hbm [shape: bf16[5,32], index: 3, kind: input, shape index: {}]
  %s4 = inlined_call_operand.hbm [shape: f32[5,1], index: 4, kind: input, shape index: {}]
  %s5 = inlined_call_operand.hbm [shape: bf16[32,4], index: 5, kind: input, shape index: {}]
  %s6 = inlined_call_operand.hbm [shape: bf16[4,32], index: 6, kind: input, shape index: {}]
  %s7 = inlined_call_operand.hbm [shape: bf16[2,5,32,32], index: 7, kind: output, shape index: {0}]
  %s8 = inlined_call_operand.hbm [shape: f32[2,5,16], index: 8, kind: output, shape index: {1}]
  %9 = xla_tuple %s7, %s8
  %s10 = sld [smem:[#allocation0]]
  $region101: #{drn_seg_forward.1} parent=0
    _
  %s12 = ssub.s32 1, %s10
  %s13 = scalar_select 0, %s12, %s10
  $region1: #{drn_seg_forward.1} parent=0
    #allocation3 [shape = 'u8[16384]{0}', space=vmem, size = 0x4000, scoped, tag = 'input window, operand 0']
    #allocation4 [shape = 's32[2]{0}', space=sflag, size = 0x8, scoped, tag = 'scoped memory for drn_seg_forward.1']
    #allocation5 [shape = 's32[2]{0}', space=sflag, size = 0x8, scoped, tag = 'scoped memory for drn_seg_forward.1']
    #allocation6 [shape = 'u8[49152]{0}', space=vmem, size = 0xc000, scoped, tag = 'input window, operand 1, single buffered']
    #allocation7 [shape = 's32[1]{0}', space=sflag, size = 0x4, scoped, tag = 'scoped memory for drn_seg_forward.1']
    #allocation8 [shape = 'u8[512]{0}', space=vmem, size = 0x400, scoped, tag = 'input window, operand 2, single buffered']
    #allocation9 [shape = 'u8[2048]{0}', space=vmem, size = 0x800, scoped, tag = 'input window, operand 3, single buffered']
    #allocation10 [shape = 's32[1]{0}', space=sflag, size = 0x4, scoped, tag = 'scoped memory for drn_seg_forward.1']
    #allocation11 [shape = 'u8[4096]{0}', space=vmem, size = 0x1000, scoped, tag = 'input window, operand 4, single buffered']
    #allocation12 [shape = 'u8[8192]{0}', space=vmem, size = 0x2000, scoped, tag = 'input window, operand 5']
    #allocation13 [shape = 's32[2]{0}', space=sflag, size = 0x8, scoped, tag = 'scoped memory for drn_seg_forward.1']
    #allocation14 [shape = 'u8[1024]{0}', space=vmem, size = 0x400, scoped, tag = 'input window, operand 6, single buffered']
    #allocation15 [shape = 'u8[40960]{0}', space=vmem, size = 0xa000, scoped, tag = 'output window, operand 0']
    #allocation16 [shape = 'u8[8192]{0}', space=vmem, size = 0x2000, scoped, tag = 'output window, operand 1']
    #allocation17 [shape = 's32[2]{0}', space=sflag, size = 0x8, scoped, tag = 'scoped memory for drn_seg_forward.1']
    %14 = vsyncpa [#allocation4], 0
    %s15 = scalar_lea.sflag [#allocation4], 1
    %16 = vsyncpa %s15, 0
    %17 = vsyncpa [#allocation7], 0
    %18 = vsyncpa [#allocation10], 0
    %19 = vsyncpa [#allocation13], 0
    %s20 = scalar_lea.sflag [#allocation13], 1
    %21 = vsyncpa %s20, 0
    %22 = vsyncpa [#allocation5], 0
    %s23 = scalar_lea.sflag [#allocation5], 1
    %24 = vsyncpa %s23, 0
    %25 = vsyncpa [#allocation17], 0
    %s26 = scalar_lea.sflag [#allocation17], 1
    %27 = vsyncpa %s26, 0
    loop: start=0, step=1, limit=6
    $region2: #{drn_seg_forward.1} parent=1 // loop_pre_header
      _
    $region3: #{drn_seg_forward.1} parent=1 // loop_header
      %s29 = sphi 0, %s33
      %p30 = scmp.ge.s32.totalorder %s29, 6
      %s36 = sphi 0, %s48
      %s37 = sphi 0, %s44
      %s38 = sphi 0, %s36
      %s39 = sphi 0, %s37
      %s40 = sphi 0, %s38
      %s41 = sphi 0, %s39
      %s51 = sphi 0, %s53
      %s54 = sphi 0, %s51
      %s55 = sphi 0, %s54
      %s71 = sphi 0, %s55
      %s75 = sphi 0, %s75
      %s77 = sphi 0, %s75
      %s78 = sphi 0, %s77
      %s92 = sphi 0, %s78
      %s96 = sphi 0, %s96
      %s98 = sphi 0, %s96
      %s99 = sphi 0, %s98
      %s113 = sphi 0, %s99
      %s117 = sphi 0, %s117
      %s119 = sphi 0, %s117
      %s120 = sphi 0, %s119
      %s134 = sphi 0, %s120
      %s138 = sphi 0, %s138
      %s140 = sphi 0, %s138
      %s141 = sphi 0, %s140
      %s155 = sphi 0, %s141
      %s161 = sphi 0, %s163
      %s164 = sphi 0, %s161
      %s165 = sphi 0, %s164
      %s181 = sphi 0, %s165
      %s185 = sphi 0, %s185
      %s187 = sphi 0, %s185
      %s188 = sphi 0, %s187
      %s202 = sphi 0, %s188
      %s210 = sphi 0, %s212
      %s213 = sphi 0, %s210
      %s214 = sphi 0, %s213
      %s230 = sphi 0, %s214
      %s236 = sphi 0, %s238
      %s239 = sphi 0, %s236
      %s240 = sphi 0, %s239
      %s256 = sphi 0, %s240
    $region4: #{drn_seg_forward.1} parent=1 // loop_header_branch
      %32 = sbr.rel (%p30) target = $region8
    $region5: #{drn_seg_forward.1} parent=1 // loop_body
      %s34 = ssub.s32 %s29, 1
      %s35 = ssub.s32 %s29, 2
      %s42 = sadd.s32 1, %s37
      %p43 = scmp.ge.s32.totalorder %s42, 2
      %s44 = scalar_select %p43, 0, %s42
      %s45 = sadd.s32 1, %s36
      %s46 = scalar_select %p43, %s45, %s36
      %p47 = scmp.ge.s32.totalorder %s46, 2
      %s48 = scalar_select %p47, 0, %s46
      %s49 = ssub.s32 %s36, %s48
      %p50 = scmp.eq.s32.totalorder %s49, 0
      %s52 = sadd.s32 %s51, 1
      %s53 = scalar_select %p50, %s51, %s52
      %p56 = pneg %p50
      %p57 = scmp.eq.s32.totalorder %s29, 3
      %p58 = por %p56, %p57
      %p59 = scmp.ne.s32.totalorder %s51, %s54
      %p60 = scmp.eq.s32.totalorder %s29, 0
      %p61 = por %p59, %p60
      %p62 = scmp.ne.s32.totalorder %s51, %s54
      %p63 = scmp.eq.s32.totalorder %s34, 3
      %p64 = por %p62, %p63
      %p65 = scmp.ne.s32.totalorder %s54, %s55
      %p66 = scmp.eq.s32.totalorder %s34, 0
      %p67 = por %p65, %p66
      %p68 = scmp.ne.s32.totalorder %s54, %s55
      %p69 = scmp.eq.s32.totalorder %s35, 3
      %p70 = por %p68, %p69
      %p72 = scmp.ne.s32.totalorder %s55, %s71
      %p73 = scmp.eq.s32.totalorder %s35, 0
      %p74 = por %p72, %p73
      %s76 = sadd.s32 %s75, 1
      %p79 = scmp.eq.s32.totalorder %s29, 3
      %p80 = scmp.ne.s32.totalorder %s75, %s77
      %p81 = scmp.eq.s32.totalorder %s29, 0
      %p82 = por %p80, %p81
      %p83 = scmp.ne.s32.totalorder %s75, %s77
      %p84 = scmp.eq.s32.totalorder %s34, 3
      %p85 = por %p83, %p84
      %p86 = scmp.ne.s32.totalorder %s77, %s78
      %p87 = scmp.eq.s32.totalorder %s34, 0
      %p88 = por %p86, %p87
      %p89 = scmp.ne.s32.totalorder %s77, %s78
      %p90 = scmp.eq.s32.totalorder %s35, 3
      %p91 = por %p89, %p90
      %p93 = scmp.ne.s32.totalorder %s78, %s92
      %p94 = scmp.eq.s32.totalorder %s35, 0
      %p95 = por %p93, %p94
      %s97 = sadd.s32 %s96, 1
      %p100 = scmp.eq.s32.totalorder %s29, 3
      %p101 = scmp.ne.s32.totalorder %s96, %s98
      %p102 = scmp.eq.s32.totalorder %s29, 0
      %p103 = por %p101, %p102
      %p104 = scmp.ne.s32.totalorder %s96, %s98
      %p105 = scmp.eq.s32.totalorder %s34, 3
      %p106 = por %p104, %p105
      %p107 = scmp.ne.s32.totalorder %s98, %s99
      %p108 = scmp.eq.s32.totalorder %s34, 0
      %p109 = por %p107, %p108
      %p110 = scmp.ne.s32.totalorder %s98, %s99
      %p111 = scmp.eq.s32.totalorder %s35, 3
      %p112 = por %p110, %p111
      %p114 = scmp.ne.s32.totalorder %s99, %s113
      %p115 = scmp.eq.s32.totalorder %s35, 0
      %p116 = por %p114, %p115
      %s118 = sadd.s32 %s117, 1
      %p121 = scmp.eq.s32.totalorder %s29, 3
      %p122 = scmp.ne.s32.totalorder %s117, %s119
      %p123 = scmp.eq.s32.totalorder %s29, 0
      %p124 = por %p122, %p123
      %p125 = scmp.ne.s32.totalorder %s117, %s119
      %p126 = scmp.eq.s32.totalorder %s34, 3
      %p127 = por %p125, %p126
      %p128 = scmp.ne.s32.totalorder %s119, %s120
      %p129 = scmp.eq.s32.totalorder %s34, 0
      %p130 = por %p128, %p129
      %p131 = scmp.ne.s32.totalorder %s119, %s120
      %p132 = scmp.eq.s32.totalorder %s35, 3
      %p133 = por %p131, %p132
      %p135 = scmp.ne.s32.totalorder %s120, %s134
      %p136 = scmp.eq.s32.totalorder %s35, 0
      %p137 = por %p135, %p136
      %s139 = sadd.s32 %s138, 1
      %p142 = scmp.eq.s32.totalorder %s29, 3
      %p143 = scmp.ne.s32.totalorder %s138, %s140
      %p144 = scmp.eq.s32.totalorder %s29, 0
      %p145 = por %p143, %p144
      %p146 = scmp.ne.s32.totalorder %s138, %s140
      %p147 = scmp.eq.s32.totalorder %s34, 3
      %p148 = por %p146, %p147
      %p149 = scmp.ne.s32.totalorder %s140, %s141
      %p150 = scmp.eq.s32.totalorder %s34, 0
      %p151 = por %p149, %p150
      %p152 = scmp.ne.s32.totalorder %s140, %s141
      %p153 = scmp.eq.s32.totalorder %s35, 3
      %p154 = por %p152, %p153
      %p156 = scmp.ne.s32.totalorder %s141, %s155
      %p157 = scmp.eq.s32.totalorder %s35, 0
      %p158 = por %p156, %p157
      %s159 = ssub.s32 %s37, %s44
      %p160 = scmp.eq.s32.totalorder %s159, 0
      %s162 = sadd.s32 %s161, 1
      %s163 = scalar_select %p160, %s161, %s162
      %p166 = pneg %p160
      %p167 = scmp.eq.s32.totalorder %s29, 3
      %p168 = por %p166, %p167
      %p169 = scmp.ne.s32.totalorder %s161, %s164
      %p170 = scmp.eq.s32.totalorder %s29, 0
      %p171 = por %p169, %p170
      %p172 = scmp.ne.s32.totalorder %s161, %s164
      %p173 = scmp.eq.s32.totalorder %s34, 3
      %p174 = por %p172, %p173
      %p175 = scmp.ne.s32.totalorder %s164, %s165
      %p176 = scmp.eq.s32.totalorder %s34, 0
      %p177 = por %p175, %p176
      %p178 = scmp.ne.s32.totalorder %s164, %s165
      %p179 = scmp.eq.s32.totalorder %s35, 3
      %p180 = por %p178, %p179
      %p182 = scmp.ne.s32.totalorder %s165, %s181
      %p183 = scmp.eq.s32.totalorder %s35, 0
      %p184 = por %p182, %p183
      %s186 = sadd.s32 %s185, 1
      %p189 = scmp.eq.s32.totalorder %s29, 3
      %p190 = scmp.ne.s32.totalorder %s185, %s187
      %p191 = scmp.eq.s32.totalorder %s29, 0
      %p192 = por %p190, %p191
      %p193 = scmp.ne.s32.totalorder %s185, %s187
      %p194 = scmp.eq.s32.totalorder %s34, 3
      %p195 = por %p193, %p194
      %p196 = scmp.ne.s32.totalorder %s187, %s188
      %p197 = scmp.eq.s32.totalorder %s34, 0
      %p198 = por %p196, %p197
      %p199 = scmp.ne.s32.totalorder %s187, %s188
      %p200 = scmp.eq.s32.totalorder %s35, 3
      %p201 = por %p199, %p200
      %p203 = scmp.ne.s32.totalorder %s188, %s202
      %p204 = scmp.eq.s32.totalorder %s35, 0
      %p205 = por %p203, %p204
      %s206 = ssub.s32 %s36, %s48
      %s207 = ssub.s32 %s37, %s44
      %s208 = sor.u32 %s206, %s207
      %p209 = scmp.eq.s32.totalorder %s208, 0
      %s211 = sadd.s32 %s210, 1
      %s212 = scalar_select %p209, %s210, %s211
      %p215 = pneg %p209
      %p216 = scmp.eq.s32.totalorder %s29, 3
      %p217 = por %p215, %p216
      %p218 = scmp.ne.s32.totalorder %s210, %s213
      %p219 = scmp.eq.s32.totalorder %s29, 0
      %p220 = por %p218, %p219
      %p221 = scmp.ne.s32.totalorder %s210, %s213
      %p222 = scmp.eq.s32.totalorder %s34, 3
      %p223 = por %p221, %p222
      %p224 = scmp.ne.s32.totalorder %s213, %s214
      %p225 = scmp.eq.s32.totalorder %s34, 0
      %p226 = por %p224, %p225
      %p227 = scmp.ne.s32.totalorder %s213, %s214
      %p228 = scmp.eq.s32.totalorder %s35, 3
      %p229 = por %p227, %p228
      %p231 = scmp.ne.s32.totalorder %s214, %s230
      %p232 = scmp.eq.s32.totalorder %s35, 0
      %p233 = por %p231, %p232
      %s234 = ssub.s32 %s36, %s48
      %p235 = scmp.eq.s32.totalorder %s234, 0
      %s237 = sadd.s32 %s236, 1
      %s238 = scalar_select %p235, %s236, %s237
      %p241 = pneg %p235
      %p242 = scmp.eq.s32.totalorder %s29, 3
      %p243 = por %p241, %p242
      %p244 = scmp.ne.s32.totalorder %s236, %s239
      %p245 = scmp.eq.s32.totalorder %s29, 0
      %p246 = por %p244, %p245
      %p247 = scmp.ne.s32.totalorder %s236, %s239
      %p248 = scmp.eq.s32.totalorder %s34, 3
      %p249 = por %p247, %p248
      %p250 = scmp.ne.s32.totalorder %s239, %s240
      %p251 = scmp.eq.s32.totalorder %s34, 0
      %p252 = por %p250, %p251
      %p253 = scmp.ne.s32.totalorder %s239, %s240
      %p254 = scmp.eq.s32.totalorder %s35, 3
      %p255 = por %p253, %p254
      %p257 = scmp.ne.s32.totalorder %s240, %s256
      %p258 = scmp.eq.s32.totalorder %s35, 0
      %p259 = por %p257, %p258
      %p260 = scmp.le.s32.totalorder 1, %s29
      %p261 = scmp.lt.s32.totalorder %s29, 5
      %p262 = pnand %p260, %p261
      %p263 = pneg %p262
      // Predicated region
      $region9: #{drn_seg_forward.1} parent=5 // pred_check
        _
      $region10: #{drn_seg_forward.1} parent=5 // pred_check_branch
        %265 = sbr.rel (%p262) target = $region12
      $region11: #{drn_seg_forward.1} parent=5 // pred_region
        %s266 = ssub.s32 %s29, 1
        // Predicated region
        $region13: #{drn_seg_forward.1} parent=11 // pred_check
          %p267 = pneg %p88
        $region14: #{drn_seg_forward.1} parent=11 // pred_check_branch
          %269 = sbr.rel (%p267) target = $region16
        $region15: #{drn_seg_forward.1} parent=11 // pred_region
          %s271 = ssub.s32 1536, 1536
          %272 = vsyncadd [#allocation7], %s271
          %s273 = sshll.u32 [#allocation6], 4
          %s274 = int_to_ptr.vmem [resolvable:$true] %s273
          %279 = dma.hbm_to_vmem [thread:$0]  %s1, 1536, %s274, [#allocation7], 64, 64, 4
        $region16: #{drn_seg_forward.1} parent=11 // pred_fallthru
          _
        // Predicated region
        $region17: #{drn_seg_forward.1} parent=11 // pred_check
          %p280 = pneg %p109
        $region18: #{drn_seg_forward.1} parent=11 // pred_check_branch
          %282 = sbr.rel (%p280) target = $region20
        $region19: #{drn_seg_forward.1} parent=11 // pred_region
          %s284 = ssub.s32 16, 16
          %285 = vsyncadd [#allocation7], %s284
          %s287 = sshll.u32 [#allocation8], 4
          %s288 = int_to_ptr.vmem [resolvable:$true] %s287
          %290 = dma.hbm_to_vmem [thread:$0]  %s2, 16, %s288, [#allocation7]
        $region20: #{drn_seg_forward.1} parent=11 // pred_fallthru
          _
        // Predicated region
        $region21: #{drn_seg_forward.1} parent=11 // pred_check
          %p291 = pneg %p130
        $region22: #{drn_seg_forward.1} parent=11 // pred_check_branch
          %293 = sbr.rel (%p291) target = $region24
        $region23: #{drn_seg_forward.1} parent=11 // pred_region
          %s295 = ssub.s32 64, 64
          %296 = vsyncadd [#allocation10], %s295
          %s298 = sshll.u32 [#allocation9], 4
          %s299 = int_to_ptr.vmem [resolvable:$true] %s298
          %301 = dma.hbm_to_vmem [thread:$0]  %s3, 64, %s299, [#allocation10]
        $region24: #{drn_seg_forward.1} parent=11 // pred_fallthru
          _
        // Predicated region
        $region25: #{drn_seg_forward.1} parent=11 // pred_check
          %p302 = pneg %p151
        $region26: #{drn_seg_forward.1} parent=11 // pred_check_branch
          %304 = sbr.rel (%p302) target = $region28
        $region27: #{drn_seg_forward.1} parent=11 // pred_region
          %s306 = ssub.s32 128, 128
          %307 = vsyncadd [#allocation10], %s306
          %s309 = sshll.u32 [#allocation11], 4
          %s310 = int_to_ptr.vmem [resolvable:$true] %s309
          %312 = dma.hbm_to_vmem [thread:$0]  %s4, 128, %s310, [#allocation10]
        $region28: #{drn_seg_forward.1} parent=11 // pred_fallthru
          _
        // Predicated region
        $region29: #{drn_seg_forward.1} parent=11 // pred_check
          %p313 = pneg %p198
        $region30: #{drn_seg_forward.1} parent=11 // pred_check_branch
          %315 = sbr.rel (%p313) target = $region32
        $region31: #{drn_seg_forward.1} parent=11 // pred_region
          %s317 = ssub.s32 32, 32
          %318 = vsyncadd [#allocation13], %s317
          %s320 = sshll.u32 [#allocation14], 4
          %s321 = int_to_ptr.vmem [resolvable:$true] %s320
          %323 = dma.hbm_to_vmem [thread:$0]  %s6, 32, %s321, [#allocation13]
        $region32: #{drn_seg_forward.1} parent=11 // pred_fallthru
          _
      $region12: #{drn_seg_forward.1} parent=5 // pred_fallthru
        _
      %p324 = scmp.lt.s32.totalorder %s29, 4
      // Predicated region
      $region33: #{drn_seg_forward.1} parent=5 // pred_check
        %p325 = pneg %p324
      $region34: #{drn_seg_forward.1} parent=5 // pred_check_branch
        %327 = sbr.rel (%p325) target = $region36
      $region35: #{drn_seg_forward.1} parent=5 // pred_region
        // Predicated region
        $region37: #{drn_seg_forward.1} parent=35 // pred_check
          %p328 = pneg %p61
        $region38: #{drn_seg_forward.1} parent=35 // pred_check_branch
          %330 = sbr.rel (%p328) target = $region40
        $region39: #{drn_seg_forward.1} parent=35 // pred_region
          %s331 = sand.u32 %s51, 1
          %s332 = scalar_lea.sflag [#allocation4], %s331
          %s333 = sand.u32 %s51, 1
          %s334 = smul.addr %s333, 16
          %s335 = scalar_lea.vmem [#allocation3], %s334
          %s337 = ssub.s32 256, 256
          %338 = vsyncadd %s332, %s337
          %s339 = smul.addr %s36, 4
          %s340 = smul.addr %s339, 64
          %s341 = scalar_lea.hbm %s0, %s340
          %s342 = sshll.u32 %s335, 4
          %s343 = int_to_ptr.vmem [resolvable:$true] %s342
          %348 = dma.hbm_to_vmem [thread:$0]  %s341, 256, %s343, %s332, 128, 128, 8
        $region40: #{drn_seg_forward.1} parent=35 // pred_fallthru
          _
        // Predicated region
        $region41: #{drn_seg_forward.1} parent=35 // pred_check
          %p349 = pneg %p171
        $region42: #{drn_seg_forward.1} parent=35 // pred_check_branch
          %351 = sbr.rel (%p349) target = $region44
        $region43: #{drn_seg_forward.1} parent=35 // pred_region
          %s352 = sand.u32 %s29, 1
          %s353 = scalar_lea.sflag [#allocation13], %s352
          %s354 = sand.u32 %s161, 1
          %s355 = smul.addr %s354, 8
          %s356 = scalar_lea.vmem [#allocation12], %s355
          %s357 = smul.u32 2, %s37
          %s359 = ssub.s32 128, 128
          %360 = vsyncadd %s353, %s359
          %s361 = smul.addr %s357, 64
          %s362 = scalar_lea.hbm %s5, %s361
          %s363 = sshll.u32 %s356, 4
          %s364 = int_to_ptr.vmem [resolvable:$true] %s363
          %369 = dma.hbm_to_vmem [thread:$0]  %s362, 128, %s364, %s353, 64, 64, 4
        $region44: #{drn_seg_forward.1} parent=35 // pred_fallthru
          _
      $region36: #{drn_seg_forward.1} parent=5 // pred_fallthru
        _
      %p370 = scmp.le.s32.totalorder 1, %s29
      %p371 = scmp.lt.s32.totalorder %s29, 5
      %p372 = pnand %p370, %p371
      %p373 = pneg %p372
      // Predicated region
      $region45: #{drn_seg_forward.1} parent=5 // pred_check
        _
      $region46: #{drn_seg_forward.1} parent=5 // pred_check_branch
        %375 = sbr.rel (%p372) target = $region48
      $region47: #{drn_seg_forward.1} parent=5 // pred_region
        %s376 = ssub.s32 %s29, 1
        %s377 = sand.u32 %s54, 1
        %s378 = scalar_lea.sflag [#allocation4], %s377
        %s379 = sand.u32 %s54, 1
        %s380 = smul.addr %s379, 16
        %s381 = scalar_lea.vmem [#allocation3], %s380
        // Predicated region
        $region49: #{drn_seg_forward.1} parent=47 // pred_check
          %p382 = pneg %p67
        $region50: #{drn_seg_forward.1} parent=47 // pred_check_branch
          %384 = sbr.rel (%p382) target = $region52
        $region51: #{drn_seg_forward.1} parent=47 // pred_region
          %385 = dma.done %s378, 256
        $region52: #{drn_seg_forward.1} parent=47 // pred_fallthru
          _
        // Predicated region
        $region53: #{drn_seg_forward.1} parent=47 // pred_check
          %p386 = pneg %p88
        $region54: #{drn_seg_forward.1} parent=47 // pred_check_branch
          %388 = sbr.rel (%p386) target = $region56
        $region55: #{drn_seg_forward.1} parent=47 // pred_region
          %389 = dma.done [#allocation7], 1536
        $region56: #{drn_seg_forward.1} parent=47 // pred_fallthru
          _
        // Predicated region
        $region57: #{drn_seg_forward.1} parent=47 // pred_check
          %p390 = pneg %p109
        $region58: #{drn_seg_forward.1} parent=47 // pred_check_branch
          %392 = sbr.rel (%p390) target = $region60
        $region59: #{drn_seg_forward.1} parent=47 // pred_region
          %393 = dma.done [#allocation7], 16
        $region60: #{drn_seg_forward.1} parent=47 // pred_fallthru
          _
        // Predicated region
        $region61: #{drn_seg_forward.1} parent=47 // pred_check
          %p394 = pneg %p130
        $region62: #{drn_seg_forward.1} parent=47 // pred_check_branch
          %396 = sbr.rel (%p394) target = $region64
        $region63: #{drn_seg_forward.1} parent=47 // pred_region
          %397 = dma.done [#allocation10], 64
        $region64: #{drn_seg_forward.1} parent=47 // pred_fallthru
          _
        // Predicated region
        $region65: #{drn_seg_forward.1} parent=47 // pred_check
          %p398 = pneg %p151
        $region66: #{drn_seg_forward.1} parent=47 // pred_check_branch
          %400 = sbr.rel (%p398) target = $region68
        $region67: #{drn_seg_forward.1} parent=47 // pred_region
          %401 = dma.done [#allocation10], 128
        $region68: #{drn_seg_forward.1} parent=47 // pred_fallthru
          _
        %s402 = sand.u32 %s34, 1
        %s403 = scalar_lea.sflag [#allocation13], %s402
        %s404 = sand.u32 %s164, 1
        %s405 = smul.addr %s404, 8
        %s406 = scalar_lea.vmem [#allocation12], %s405
        // Predicated region
        $region69: #{drn_seg_forward.1} parent=47 // pred_check
          %p407 = pneg %p177
        $region70: #{drn_seg_forward.1} parent=47 // pred_check_branch
          %409 = sbr.rel (%p407) target = $region72
        $region71: #{drn_seg_forward.1} parent=47 // pred_region
          %410 = dma.done %s403, 128
        $region72: #{drn_seg_forward.1} parent=47 // pred_fallthru
          _
        // Predicated region
        $region73: #{drn_seg_forward.1} parent=47 // pred_check
          %p411 = pneg %p198
        $region74: #{drn_seg_forward.1} parent=47 // pred_check_branch
          %413 = sbr.rel (%p411) target = $region76
        $region75: #{drn_seg_forward.1} parent=47 // pred_region
          %414 = dma.done [#allocation13], 32
        $region76: #{drn_seg_forward.1} parent=47 // pred_fallthru
          _
        %s415 = sand.u32 %s54, 1
        %s416 = scalar_lea.sflag [#allocation4], %s415
        %s417 = sand.u32 %s54, 1
        %s418 = smul.addr %s417, 16
        %s419 = scalar_lea.vmem [#allocation3], %s418
        %p420 = pneg %p67
        %p421 = pneg %p64
        %p422 = pneg %p88
        %p423 = pneg %p85
        %p424 = pneg %p109
        %p425 = pneg %p106
        %p426 = pneg %p130
        %p427 = pneg %p127
        %p428 = pneg %p151
        %p429 = pneg %p148
        %s430 = sand.u32 %s34, 1
        %s431 = scalar_lea.sflag [#allocation13], %s430
        %s432 = sand.u32 %s164, 1
        %s433 = smul.addr %s432, 8
        %s434 = scalar_lea.vmem [#allocation12], %s433
        %p435 = pneg %p177
        %p436 = pneg %p174
        %p437 = pneg %p198
        %p438 = pneg %p195
        %p439 = pneg %p226
        %p440 = pneg %p223
        %s441 = sand.u32 %s213, 1
        %s442 = scalar_lea.sflag [#allocation5], %s441
        %s443 = sand.u32 %s213, 1
        %s444 = smul.addr %s443, 40
        %s445 = scalar_lea.vmem [#allocation15], %s444
        %p446 = pneg %p252
        %p447 = pneg %p249
        %s448 = sand.u32 %s239, 1
        %s449 = scalar_lea.sflag [#allocation17], %s448
        %s450 = sand.u32 %s239, 1
        %s451 = smul.addr %s450, 8
        %s452 = scalar_lea.vmem [#allocation16], %s451
        %s453 = smul.u32 2, %s39
        %s454 = smul.u32 2, %s39
        %p456 = scmp.eq.s32.totalorder %s39, 0
        // Predicated region
        $region77: #{drn_seg_forward.1} parent=47 // pred_check
          %p457 = pneg %p456
        $region78: #{drn_seg_forward.1} parent=47 // pred_check_branch
          %459 = sbr.rel (%p457) target = $region80
        $region79: #{drn_seg_forward.1} parent=47 // pred_region
          %v460 = vld [vmem:[%s381] sm:$0xff]
          %v461 = vld [vmem:[%s381 + $0x8] sm:$0xff]
          %v462 = vld [vmem:[#allocation6] sm:$0xf]
          %v463 = vld [vmem:[#allocation6 + $0x4] sm:$0xf]
          %v464 = vld [vmem:[#allocation6 + $0x8] sm:$0xf]
          %v465 = vld [vmem:[#allocation6 + $0xc] sm:$0xf]
          %v466 = vld [vmem:[#allocation6 + $0x10] sm:$0xf]
          %v467 = vld [vmem:[#allocation6 + $0x14] sm:$0xf]
          %v468 = vld [vmem:[#allocation6 + $0x18] sm:$0xf]
          %v469 = vld [vmem:[#allocation6 + $0x1c] sm:$0xf]
          %v470 = vld [vmem:[#allocation6 + $0x20] sm:$0xf]
          %v471 = vld [vmem:[#allocation6 + $0x24] sm:$0xf]
          %v472 = vld [vmem:[#allocation6 + $0x28] sm:$0xf]
          %v473 = vld [vmem:[#allocation6 + $0x2c] sm:$0xf]
          %v474 = vld [vmem:[#allocation6 + $0x30] sm:$0xf]
          %v475 = vld [vmem:[#allocation6 + $0x34] sm:$0xf]
          %v476 = vld [vmem:[#allocation6 + $0x38] sm:$0xf]
          %v477 = vld [vmem:[#allocation6 + $0x3c] sm:$0xf]
          %v478 = vld [vmem:[#allocation6 + $0x40] sm:$0xf]
          %v479 = vld [vmem:[#allocation6 + $0x44] sm:$0xf]
          %v480 = vld [vmem:[#allocation6 + $0x48] sm:$0xf]
          %v481 = vld [vmem:[#allocation6 + $0x4c] sm:$0xf]
          %v482 = vld [vmem:[#allocation6 + $0x50] sm:$0xf]
          %v483 = vld [vmem:[#allocation6 + $0x54] sm:$0xf]
          %v484 = vld [vmem:[#allocation6 + $0x58] sm:$0xf]
          %v485 = vld [vmem:[#allocation6 + $0x5c] sm:$0xf]
          %v486 = vld [vmem:[#allocation8] sm:$0x1]
          %v488 = vlaneseq
          %v489 = vshrl.u32 %v488, 7
          %v490 = vsub.s32 0, %v489
          %v491 = vrot.slane %v486, %v490
          %v495 = vunpack.c.l.b16 %v460
          %v496 = vunpack.c.h.b16 %v460
          %v497 = vunpack.c.l.b16 %v461
          %v498 = vunpack.c.h.b16 %v461
          %v499 = vpack.c.b16 %v497, %v495
          %v500 = vpack.c.b16 %v498, %v496
          %v526 = vunpack.c.l.b16 %v462
          %v527 = vunpack.c.l.b16 %v463
          %v528 = vunpack.c.l.b16 %v464
          %v529 = vunpack.c.l.b16 %v465
          %v530 = vunpack.c.l.b16 %v466
          %v531 = vunpack.c.l.b16 %v467
          %v532 = vunpack.c.l.b16 %v468
          %v533 = vunpack.c.l.b16 %v469
          %v534 = vunpack.c.l.b16 %v470
          %v535 = vunpack.c.l.b16 %v471
          %v536 = vunpack.c.l.b16 %v472
          %v537 = vunpack.c.l.b16 %v473
          %v538 = vunpack.c.l.b16 %v474
          %v539 = vunpack.c.l.b16 %v475
          %v540 = vunpack.c.l.b16 %v476
          %v541 = vunpack.c.l.b16 %v477
          %v542 = vunpack.c.l.b16 %v478
          %v543 = vunpack.c.l.b16 %v479
          %v544 = vunpack.c.l.b16 %v480
          %v545 = vunpack.c.l.b16 %v481
          %v546 = vunpack.c.l.b16 %v482
          %v547 = vunpack.c.l.b16 %v483
          %v548 = vunpack.c.l.b16 %v484
          %v549 = vunpack.c.l.b16 %v485
          %v550 = vpack.c.b16 %v527, %v526
          %v551 = vpack.c.b16 %v529, %v528
          %v552 = vpack.c.b16 %v531, %v530
          %v553 = vpack.c.b16 %v533, %v532
          %v554 = vpack.c.b16 %v535, %v534
          %v555 = vpack.c.b16 %v537, %v536
          %v556 = vpack.c.b16 %v539, %v538
          %v557 = vpack.c.b16 %v541, %v540
          %v558 = vpack.c.b16 %v543, %v542
          %v559 = vpack.c.b16 %v545, %v544
          %v560 = vpack.c.b16 %v547, %v546
          %v561 = vpack.c.b16 %v549, %v548
          %vm574 = vcmask 523264
          %v576 = vsel %vm574, %v500, 0
          %578 = vmatprep.subr.bf16.mxu0 0
          %579 = vmatpush1.bf16.msra.mxu0 %v550
          %580 = vmatprep.subr.bf16.mxu0 0
          %581 = vmatpush1.bf16.msra.mxu0 %v551
          %582 = vmatprep.subr.bf16.mxu0 0
          %583 = vmatpush1.bf16.msra.mxu0 %v552
          %584 = vmatprep.subr.bf16.mxu0 0
          %585 = vmatpush1.bf16.msra.mxu0 %v553
          %586 = vmatprep.subr.bf16.mxu0 0
          %587 = vmatpush1.bf16.msra.mxu0 %v554
          %588 = vmatprep.subr.bf16.mxu0 0
          %589 = vmatpush1.bf16.msra.mxu0 %v555
          %590 = vmatprep.subr.bf16.mxu0 0
          %591 = vmatpush1.bf16.msra.mxu0 %v556
          %592 = vmatprep.subr.bf16.mxu0 0
          %593 = vmatpush1.bf16.msra.mxu0 %v557
          %594 = vmatprep.subr.bf16.mxu0 0
          %595 = vmatpush1.bf16.msra.mxu0 %v558
          %596 = vmatprep.subr.bf16.mxu0 0
          %597 = vmatpush1.bf16.msra.mxu0 %v559
          %598 = vmatprep.subr.bf16.mxu0 0
          %599 = vmatpush1.bf16.msra.mxu0 %v560
          %600 = vmatprep.subr.bf16.mxu0 0
          %601 = vmatpush1.bf16.msra.mxu0 %v561
          %602 = vmatprep.subr.bf16.mxu0 0
          %603 = vmatpush1.bf16.msra.mxu0 0
          %604 = vmatprep.subr.bf16.mxu0 0
          %605 = vmatpush1.bf16.msra.mxu0 0
          %606 = vmatprep.subr.bf16.mxu0 0
          %607 = vmatpush1.bf16.msra.mxu0 0
          %608 = vmatprep.subr.bf16.mxu0 0
          %609 = vmatpush1.bf16.msra.mxu0 0
          %610 = vmatprep.mubr.bf16.mxu0 %v576
          %611 = vmatmul.mubr.bf16.gmra.mrb[0].mxu0 %v499
          %v612 = vpop.f32.mrb[0].mxu0
          %v613 = vadd.f32 %v491, %v612
          %v614 = vpop.f32.mrb[0].mxu0
          %v615 = vpop.f32.mrb[0].mxu0
          %v616 = vadd.f32 %v491, %v615
          %v617 = vpop.f32.mrb[0].mxu0
          %618 = vdwg.mxu0
          %v619 = vmax.f32 %v613, 0.0
          %v620 = vmax.f32 %v616, 0.0
          %v621 = vpack.c.bf16 %v620, %v619
          %v622 = vld [vmem:[#allocation9] sm:$0x7]
          %v623 = vld [vmem:[#allocation11] sm:$0x1f]
          %625 = vset.pattern.permute.xlu0 0
          %626 = vperm.xlu0 %625, %v623
          %v627 = vpop.permute.xlu0 %626
          %vm629 = vcmask 261120
          %v631 = vsel %vm629, %v622, 0
          %v634 = vsel %vm629, %v621, 0
          %636 = vmatprep.subr.bf16.mxu0 0
          %637 = vmatpush1.bf16.xpose.msra.mxu0 %v634
          %638 = vmatprep.subr.bf16.mxu0 0
          %639 = vmatpush1.bf16.xpose.msra.mxu0 0
          %640 = vmatprep.subr.bf16.mxu0 0
          %641 = vmatpush1.bf16.xpose.msra.mxu0 0
          %642 = vmatprep.subr.bf16.mxu0 0
          %643 = vmatpush1.bf16.xpose.msra.mxu0 0
          %644 = vmatprep.subr.bf16.mxu0 0
          %645 = vmatpush1.bf16.xpose.msra.mxu0 0
          %646 = vmatprep.subr.bf16.mxu0 0
          %647 = vmatpush1.bf16.xpose.msra.mxu0 0
          %648 = vmatprep.subr.bf16.mxu0 0
          %649 = vmatpush1.bf16.xpose.msra.mxu0 0
          %650 = vmatprep.subr.bf16.mxu0 0
          %651 = vmatpush1.bf16.xpose.msra.mxu0 0
          %652 = vmatprep.subr.bf16.mxu0 0
          %653 = vmatpush1.bf16.xpose.msra.mxu0 0
          %654 = vmatprep.subr.bf16.mxu0 0
          %655 = vmatpush1.bf16.xpose.msra.mxu0 0
          %656 = vmatprep.subr.bf16.mxu0 0
          %657 = vmatpush1.bf16.xpose.msra.mxu0 0
          %658 = vmatprep.subr.bf16.mxu0 0
          %659 = vmatpush1.bf16.xpose.msra.mxu0 0
          %660 = vmatprep.subr.bf16.mxu0 0
          %661 = vmatpush1.bf16.xpose.msra.mxu0 0
          %662 = vmatprep.subr.bf16.mxu0 0
          %663 = vmatpush1.bf16.xpose.msra.mxu0 0
          %664 = vmatprep.subr.bf16.mxu0 0
          %665 = vmatpush1.bf16.xpose.msra.mxu0 0
          %666 = vmatprep.subr.bf16.mxu0 0
          %667 = vmatpush1.bf16.xpose.msra.mxu0 0
          %668 = vmatprep.mubr.bf16.mxu0 0
          %669 = vmatmul.mubr.bf16.gmra.mrb[0].mxu0 %v631
          %v670 = vpop.f32.mrb[0].mxu0
          %v671 = vadd.f32 %v627, %v670
          %v672 = vpop.f32.mrb[0].mxu0
          %v673 = vpop.f32.mrb[0].mxu0
          %v674 = vpop.f32.mrb[0].mxu0
          %675 = vdwg.mxu0
          %vm676 = vcmask 126976
          %677 = vst.msk [vmem:[%s452] sm:$0x1f] %vm676, %v671
          %679 = vrot.lane.b32.xlu0 %v671, 124
          %v680 = vpop.permute.xlu0 %679
          %682 = vrot.lane.b32.xlu0 %v671, 120
          %v683 = vpop.permute.xlu0 %682
          %685 = vrot.lane.b32.xlu0 %v671, 116
          %v686 = vpop.permute.xlu0 %685
          %v688 = vcombine.low %v671, %v683
          %v689 = vcombine.high %v671, %v683
          %v691 = vunpack.c.l.s4 1983009808
          %v692 = vunpack.c.0.s8 %v691
          %v693 = vlaneseq
          %v694 = vshrl.u32 %v693, 7
          %v695 = vsub.s32 %v692, %v694
          %v696 = vrot.slane %v688, %v695
          %v698 = vunpack.c.l.s4 1983009808
          %v699 = vunpack.c.0.s8 %v698
          %v700 = vlaneseq
          %v701 = vshrl.u32 %v700, 7
          %v702 = vsub.s32 %v699, %v701
          %v703 = vrot.slane %v689, %v702
          %v704 = vcombine.low %v680, %v686
          %v705 = vcombine.high %v680, %v686
          %v707 = vunpack.c.l.s4 1983009808
          %v708 = vunpack.c.0.s8 %v707
          %v709 = vlaneseq
          %v710 = vshrl.u32 %v709, 7
          %v711 = vsub.s32 %v708, %v710
          %v712 = vrot.slane %v704, %v711
          %v714 = vunpack.c.l.s4 1983009808
          %v715 = vunpack.c.0.s8 %v714
          %v716 = vlaneseq
          %v717 = vshrl.u32 %v716, 7
          %v718 = vsub.s32 %v715, %v717
          %v719 = vrot.slane %v705, %v718
          %v720 = vcombine.low %v696, %v712
          %v721 = vcombine.high %v696, %v712
          %v723 = vunpack.c.l.s4 1934713408
          %v724 = vunpack.c.0.s8 %v723
          %v725 = vlaneseq
          %v726 = vshrl.u32 %v725, 7
          %v727 = vsub.s32 %v724, %v726
          %v728 = vrot.slane %v720, %v727
          %v730 = vunpack.c.l.s4 1934713408
          %v731 = vunpack.c.0.s8 %v730
          %v732 = vlaneseq
          %v733 = vshrl.u32 %v732, 7
          %v734 = vsub.s32 %v731, %v733
          %v735 = vrot.slane %v721, %v734
          %v736 = vcombine.low %v703, %v719
          %v737 = vcombine.high %v728, 0.0
          %v738 = vcombine.high %v735, 0.0
          %v739 = vcombine.low %v728, %v735
          %v741 = vunpack.c.l.s4 1983009808
          %v742 = vunpack.c.0.s8 %v741
          %v743 = vlaneseq
          %v744 = vshrl.u32 %v743, 7
          %v745 = vsub.s32 %v742, %v744
          %v746 = vrot.slane %v739, %v745
          %v747 = vcombine.low %v737, %v738
          %v749 = vunpack.c.l.s4 1983009808
          %v750 = vunpack.c.0.s8 %v749
          %v751 = vlaneseq
          %v752 = vshrl.u32 %v751, 7
          %v753 = vsub.s32 %v750, %v752
          %v754 = vrot.slane %v747, %v753
          %v756 = vunpack.c.l.s4 1934713408
          %v757 = vunpack.c.0.s8 %v756
          %v758 = vlaneseq
          %v759 = vshrl.u32 %v758, 7
          %v760 = vsub.s32 %v757, %v759
          %v761 = vrot.slane %v736, %v760
          %v763 = vunpack.c.l.s4 1983009808
          %v764 = vunpack.c.0.s8 %v763
          %v765 = vlaneseq
          %v766 = vshrl.u32 %v765, 7
          %v767 = vsub.s32 %v764, %v766
          %v768 = vrot.slane %v761, %v767
          %v769 = vcombine.low %v746, %v754
          %v770 = vcombine.high %v746, %v754
          %v772 = vunpack.c.l.s4 1934713408
          %v773 = vunpack.c.0.s8 %v772
          %v774 = vlaneseq
          %v775 = vshrl.u32 %v774, 7
          %v776 = vsub.s32 %v773, %v775
          %v777 = vrot.slane %v769, %v776
          %v779 = vunpack.c.l.s4 1934713408
          %v780 = vunpack.c.0.s8 %v779
          %v781 = vlaneseq
          %v782 = vshrl.u32 %v781, 7
          %v783 = vsub.s32 %v780, %v782
          %v784 = vrot.slane %v770, %v783
          %v785 = vcombine.high %v768, 0.0
          %v787 = vunpack.c.l.s4 1934713408
          %v788 = vunpack.c.0.s8 %v787
          %v789 = vlaneseq
          %v790 = vshrl.u32 %v789, 7
          %v791 = vsub.s32 %v788, %v790
          %v792 = vrot.slane %v768, %v791
          %v794 = vunpack.c.l.s4 1934713408
          %v795 = vunpack.c.0.s8 %v794
          %v796 = vlaneseq
          %v797 = vshrl.u32 %v796, 7
          %v798 = vsub.s32 %v795, %v797
          %v799 = vrot.slane %v785, %v798
          %v800 = vcombine.low %v777, %v792
          %v801 = vcombine.high %v777, %v792
          %v802 = vcombine.low %v784, %v799
          %v803 = vcombine.high %v784, %v799
          %v804 = vcombine.low %v800, %v802
          %v805 = vcombine.high %v800, %v802
          %v807 = vunpack.c.l.s4 1983009808
          %v808 = vunpack.c.0.s8 %v807
          %v809 = vlaneseq
          %v810 = vshrl.u32 %v809, 7
          %v811 = vsub.s32 %v808, %v810
          %v812 = vrot.slane %v804, %v811
          %v814 = vunpack.c.l.s4 1983009808
          %v815 = vunpack.c.0.s8 %v814
          %v816 = vlaneseq
          %v817 = vshrl.u32 %v816, 7
          %v818 = vsub.s32 %v815, %v817
          %v819 = vrot.slane %v805, %v818
          %v820 = vcombine.low %v801, %v803
          %v821 = vcombine.high %v801, %v803
          %v823 = vunpack.c.l.s4 1983009808
          %v824 = vunpack.c.0.s8 %v823
          %v825 = vlaneseq
          %v826 = vshrl.u32 %v825, 7
          %v827 = vsub.s32 %v824, %v826
          %v828 = vrot.slane %v820, %v827
          %v830 = vunpack.c.l.s4 1983009808
          %v831 = vunpack.c.0.s8 %v830
          %v832 = vlaneseq
          %v833 = vshrl.u32 %v832, 7
          %v834 = vsub.s32 %v831, %v833
          %v835 = vrot.slane %v821, %v834
          %v836 = vcombine.low %v812, %v828
          %v837 = vcombine.high %v812, %v828
          %v839 = vunpack.c.l.s4 1934713408
          %v840 = vunpack.c.0.s8 %v839
          %v841 = vlaneseq
          %v842 = vshrl.u32 %v841, 7
          %v843 = vsub.s32 %v840, %v842
          %v844 = vrot.slane %v836, %v843
          %v846 = vunpack.c.l.s4 1934713408
          %v847 = vunpack.c.0.s8 %v846
          %v848 = vlaneseq
          %v849 = vshrl.u32 %v848, 7
          %v850 = vsub.s32 %v847, %v849
          %v851 = vrot.slane %v837, %v850
          %v852 = vcombine.low %v819, %v835
          %v853 = vcombine.high %v844, 0.0
          %v854 = vcombine.high %v851, 0.0
          %v856 = vunpack.c.l.s4 1934713408
          %v857 = vunpack.c.0.s8 %v856
          %v858 = vlaneseq
          %v859 = vshrl.u32 %v858, 7
          %v860 = vsub.s32 %v857, %v859
          %v861 = vrot.slane %v852, %v860
          %863 = vrot.lane.b32.xlu0 %v853, 4
          %v864 = vpop.permute.xlu0 %863
          %867 = vrot.lane.b32.xlu0 %v851, 8
          %v868 = vpop.permute.xlu0 %867
          %871 = vrot.lane.b32.xlu0 %v854, 12
          %v872 = vpop.permute.xlu0 %871
          %875 = vrot.lane.b32.xlu0 %v861, 16
          %v876 = vpop.permute.xlu0 %875
          %vm878 = vcmask 31744
          %v879 = vsel %vm878, %v844, %v864
          %vm880 = vcmask 64512
          %v881 = vsel %vm880, %v879, %v868
          %vm882 = vcmask 97280
          %v883 = vsel %vm882, %v881, %v872
          %vm884 = vcmask 130048
          %v885 = vsel %vm884, %v883, %v876
          %v886 = vpack.c.bf16 %v885, %v885
          %vm887 = vcmask 156672
          %888 = vst.msk [vmem:[#allocation2] sm:$0x3] %vm887, %v886
        $region80: #{drn_seg_forward.1} parent=47 // pred_fallthru
          _
        %v889 = vld [vmem:[%s406] sm:$0xf]
        %v890 = vld [vmem:[%s406 + $0x4] sm:$0xf]
        %v891 = vld [vmem:[#allocation2] sm:$0x3]
        %v894 = vunpack.c.l.b16 %v889
        %v895 = vunpack.c.l.b16 %v890
        %v896 = vpack.c.b16 %v895, %v894
        %vm897 = vcmask 31744
        %v899 = vsel %vm897, %v896, 0
        %vm901 = vcmask 1041408
        %v903 = vsel %vm901, %v891, 0
        %905 = vmatprep.subr.bf16.mxu0 0
        %906 = vmatpush1.bf16.msra.mxu0 %v903
        %907 = vmatprep.subr.bf16.mxu0 0
        %908 = vmatpush1.bf16.msra.mxu0 0
        %909 = vmatprep.subr.bf16.mxu0 0
        %910 = vmatpush1.bf16.msra.mxu0 0
        %911 = vmatprep.subr.bf16.mxu0 0
        %912 = vmatpush1.bf16.msra.mxu0 0
        %913 = vmatprep.subr.bf16.mxu0 0
        %914 = vmatpush1.bf16.msra.mxu0 0
        %915 = vmatprep.subr.bf16.mxu0 0
        %916 = vmatpush1.bf16.msra.mxu0 0
        %917 = vmatprep.subr.bf16.mxu0 0
        %918 = vmatpush1.bf16.msra.mxu0 0
        %919 = vmatprep.subr.bf16.mxu0 0
        %920 = vmatpush1.bf16.msra.mxu0 0
        %921 = vmatprep.subr.bf16.mxu0 0
        %922 = vmatpush1.bf16.msra.mxu0 0
        %923 = vmatprep.subr.bf16.mxu0 0
        %924 = vmatpush1.bf16.msra.mxu0 0
        %925 = vmatprep.subr.bf16.mxu0 0
        %926 = vmatpush1.bf16.msra.mxu0 0
        %927 = vmatprep.subr.bf16.mxu0 0
        %928 = vmatpush1.bf16.msra.mxu0 0
        %929 = vmatprep.subr.bf16.mxu0 0
        %930 = vmatpush1.bf16.msra.mxu0 0
        %931 = vmatprep.subr.bf16.mxu0 0
        %932 = vmatpush1.bf16.msra.mxu0 0
        %933 = vmatprep.subr.bf16.mxu0 0
        %934 = vmatpush1.bf16.msra.mxu0 0
        %935 = vmatprep.subr.bf16.mxu0 0
        %936 = vmatpush1.bf16.msra.mxu0 0
        %937 = vmatprep.mubr.bf16.mxu0 0
        %938 = vmatmul.mubr.bf16.gmra.mrb[0].mxu0 %v899
        %v939 = vpop.f32.mrb[0].mxu0
        %v940 = vadd.f32 0.0, %v939
        %v941 = vpop.f32.mrb[0].mxu0
        %v942 = vpop.f32.mrb[0].mxu0
        %v943 = vadd.f32 0.0, %v942
        %v944 = vpop.f32.mrb[0].mxu0
        %945 = vdwg.mxu0
        %948 = vrot.lane.b32.xlu0 %v940, 124
        %v949 = vpop.permute.xlu0 %948
        %950 = vrot.lane.b32.xlu0 %v943, 124
        %v951 = vpop.permute.xlu0 %950
        %954 = vrot.lane.b32.xlu0 %v940, 120
        %v955 = vpop.permute.xlu0 %954
        %956 = vrot.lane.b32.xlu0 %v943, 120
        %v957 = vpop.permute.xlu0 %956
        %960 = vrot.lane.b32.xlu0 %v940, 116
        %v961 = vpop.permute.xlu0 %960
        %962 = vrot.lane.b32.xlu0 %v943, 116
        %v963 = vpop.permute.xlu0 %962
        %966 = vrot.lane.b32.xlu0 %v940, 112
        %v967 = vpop.permute.xlu0 %966
        %968 = vrot.lane.b32.xlu0 %v943, 112
        %v969 = vpop.permute.xlu0 %968
        %v972 = vcombine.low %v940, %v955
        %v973 = vcombine.high %v940, %v955
        %v975 = vunpack.c.l.s4 1983009808
        %v976 = vunpack.c.0.s8 %v975
        %v977 = vlaneseq
        %v978 = vshrl.u32 %v977, 7
        %v979 = vsub.s32 %v976, %v978
        %v980 = vrot.slane %v972, %v979
        %v982 = vunpack.c.l.s4 1983009808
        %v983 = vunpack.c.0.s8 %v982
        %v984 = vlaneseq
        %v985 = vshrl.u32 %v984, 7
        %v986 = vsub.s32 %v983, %v985
        %v987 = vrot.slane %v973, %v986
        %v988 = vcombine.low %v949, %v961
        %v989 = vcombine.high %v949, %v961
        %v991 = vunpack.c.l.s4 1983009808
        %v992 = vunpack.c.0.s8 %v991
        %v993 = vlaneseq
        %v994 = vshrl.u32 %v993, 7
        %v995 = vsub.s32 %v992, %v994
        %v996 = vrot.slane %v988, %v995
        %v998 = vunpack.c.l.s4 1983009808
        %v999 = vunpack.c.0.s8 %v998
        %v1000 = vlaneseq
        %v1001 = vshrl.u32 %v1000, 7
        %v1002 = vsub.s32 %v999, %v1001
        %v1003 = vrot.slane %v989, %v1002
        %v1004 = vcombine.high %v967, 0.0
        %v1006 = vunpack.c.l.s4 1983009808
        %v1007 = vunpack.c.0.s8 %v1006
        %v1008 = vlaneseq
        %v1009 = vshrl.u32 %v1008, 7
        %v1010 = vsub.s32 %v1007, %v1009
        %v1011 = vrot.slane %v967, %v1010
        %v1013 = vunpack.c.l.s4 1983009808
        %v1014 = vunpack.c.0.s8 %v1013
        %v1015 = vlaneseq
        %v1016 = vshrl.u32 %v1015, 7
        %v1017 = vsub.s32 %v1014, %v1016
        %v1018 = vrot.slane %v1004, %v1017
        %v1019 = vcombine.low %v980, %v996
        %v1020 = vcombine.high %v980, %v996
        %v1022 = vunpack.c.l.s4 1934713408
        %v1023 = vunpack.c.0.s8 %v1022
        %v1024 = vlaneseq
        %v1025 = vshrl.u32 %v1024, 7
        %v1026 = vsub.s32 %v1023, %v1025
        %v1027 = vrot.slane %v1019, %v1026
        %v1029 = vunpack.c.l.s4 1934713408
        %v1030 = vunpack.c.0.s8 %v1029
        %v1031 = vlaneseq
        %v1032 = vshrl.u32 %v1031, 7
        %v1033 = vsub.s32 %v1030, %v1032
        %v1034 = vrot.slane %v1020, %v1033
        %v1035 = vcombine.low %v987, %v1003
        %v1036 = vcombine.high %v987, %v1003
        %v1038 = vunpack.c.l.s4 1934713408
        %v1039 = vunpack.c.0.s8 %v1038
        %v1040 = vlaneseq
        %v1041 = vshrl.u32 %v1040, 7
        %v1042 = vsub.s32 %v1039, %v1041
        %v1043 = vrot.slane %v1035, %v1042
        %v1045 = vunpack.c.l.s4 1934713408
        %v1046 = vunpack.c.0.s8 %v1045
        %v1047 = vlaneseq
        %v1048 = vshrl.u32 %v1047, 7
        %v1049 = vsub.s32 %v1046, %v1048
        %v1050 = vrot.slane %v1036, %v1049
        %v1051 = vcombine.high %v1011, 0.0
        %v1053 = vunpack.c.l.s4 1934713408
        %v1054 = vunpack.c.0.s8 %v1053
        %v1055 = vlaneseq
        %v1056 = vshrl.u32 %v1055, 7
        %v1057 = vsub.s32 %v1054, %v1056
        %v1058 = vrot.slane %v1011, %v1057
        %v1060 = vunpack.c.l.s4 1934713408
        %v1061 = vunpack.c.0.s8 %v1060
        %v1062 = vlaneseq
        %v1063 = vshrl.u32 %v1062, 7
        %v1064 = vsub.s32 %v1061, %v1063
        %v1065 = vrot.slane %v1051, %v1064
        %v1066 = vcombine.high %v1018, 0.0
        %v1068 = vunpack.c.l.s4 1934713408
        %v1069 = vunpack.c.0.s8 %v1068
        %v1070 = vlaneseq
        %v1071 = vshrl.u32 %v1070, 7
        %v1072 = vsub.s32 %v1069, %v1071
        %v1073 = vrot.slane %v1018, %v1072
        %v1075 = vunpack.c.l.s4 1934713408
        %v1076 = vunpack.c.0.s8 %v1075
        %v1077 = vlaneseq
        %v1078 = vshrl.u32 %v1077, 7
        %v1079 = vsub.s32 %v1076, %v1078
        %v1080 = vrot.slane %v1066, %v1079
        %v1081 = vcombine.low %v1027, %v1058
        %v1082 = vcombine.high %v1027, %v1058
        %v1083 = vcombine.low %v1034, %v1065
        %v1084 = vcombine.high %v1034, %v1065
        %v1085 = vcombine.low %v1043, %v1073
        %v1086 = vcombine.high %v1043, %v1073
        %v1087 = vcombine.low %v1050, %v1080
        %v1088 = vcombine.high %v1050, %v1080
        %v1089 = vcombine.low %v943, %v957
        %v1090 = vcombine.high %v943, %v957
        %v1092 = vunpack.c.l.s4 1983009808
        %v1093 = vunpack.c.0.s8 %v1092
        %v1094 = vlaneseq
        %v1095 = vshrl.u32 %v1094, 7
        %v1096 = vsub.s32 %v1093, %v1095
        %v1097 = vrot.slane %v1089, %v1096
        %v1099 = vunpack.c.l.s4 1983009808
        %v1100 = vunpack.c.0.s8 %v1099
        %v1101 = vlaneseq
        %v1102 = vshrl.u32 %v1101, 7
        %v1103 = vsub.s32 %v1100, %v1102
        %v1104 = vrot.slane %v1090, %v1103
        %v1105 = vcombine.low %v951, %v963
        %v1106 = vcombine.high %v951, %v963
        %v1108 = vunpack.c.l.s4 1983009808
        %v1109 = vunpack.c.0.s8 %v1108
        %v1110 = vlaneseq
        %v1111 = vshrl.u32 %v1110, 7
        %v1112 = vsub.s32 %v1109, %v1111
        %v1113 = vrot.slane %v1105, %v1112
        %v1115 = vunpack.c.l.s4 1983009808
        %v1116 = vunpack.c.0.s8 %v1115
        %v1117 = vlaneseq
        %v1118 = vshrl.u32 %v1117, 7
        %v1119 = vsub.s32 %v1116, %v1118
        %v1120 = vrot.slane %v1106, %v1119
        %v1121 = vcombine.high %v969, 0.0
        %v1123 = vunpack.c.l.s4 1983009808
        %v1124 = vunpack.c.0.s8 %v1123
        %v1125 = vlaneseq
        %v1126 = vshrl.u32 %v1125, 7
        %v1127 = vsub.s32 %v1124, %v1126
        %v1128 = vrot.slane %v969, %v1127
        %v1130 = vunpack.c.l.s4 1983009808
        %v1131 = vunpack.c.0.s8 %v1130
        %v1132 = vlaneseq
        %v1133 = vshrl.u32 %v1132, 7
        %v1134 = vsub.s32 %v1131, %v1133
        %v1135 = vrot.slane %v1121, %v1134
        %v1136 = vcombine.low %v1097, %v1113
        %v1137 = vcombine.high %v1097, %v1113
        %v1139 = vunpack.c.l.s4 1934713408
        %v1140 = vunpack.c.0.s8 %v1139
        %v1141 = vlaneseq
        %v1142 = vshrl.u32 %v1141, 7
        %v1143 = vsub.s32 %v1140, %v1142
        %v1144 = vrot.slane %v1136, %v1143
        %v1146 = vunpack.c.l.s4 1934713408
        %v1147 = vunpack.c.0.s8 %v1146
        %v1148 = vlaneseq
        %v1149 = vshrl.u32 %v1148, 7
        %v1150 = vsub.s32 %v1147, %v1149
        %v1151 = vrot.slane %v1137, %v1150
        %v1152 = vcombine.low %v1104, %v1120
        %v1153 = vcombine.high %v1104, %v1120
        %v1155 = vunpack.c.l.s4 1934713408
        %v1156 = vunpack.c.0.s8 %v1155
        %v1157 = vlaneseq
        %v1158 = vshrl.u32 %v1157, 7
        %v1159 = vsub.s32 %v1156, %v1158
        %v1160 = vrot.slane %v1152, %v1159
        %v1162 = vunpack.c.l.s4 1934713408
        %v1163 = vunpack.c.0.s8 %v1162
        %v1164 = vlaneseq
        %v1165 = vshrl.u32 %v1164, 7
        %v1166 = vsub.s32 %v1163, %v1165
        %v1167 = vrot.slane %v1153, %v1166
        %v1168 = vcombine.high %v1128, 0.0
        %v1170 = vunpack.c.l.s4 1934713408
        %v1171 = vunpack.c.0.s8 %v1170
        %v1172 = vlaneseq
        %v1173 = vshrl.u32 %v1172, 7
        %v1174 = vsub.s32 %v1171, %v1173
        %v1175 = vrot.slane %v1128, %v1174
        %v1177 = vunpack.c.l.s4 1934713408
        %v1178 = vunpack.c.0.s8 %v1177
        %v1179 = vlaneseq
        %v1180 = vshrl.u32 %v1179, 7
        %v1181 = vsub.s32 %v1178, %v1180
        %v1182 = vrot.slane %v1168, %v1181
        %v1183 = vcombine.high %v1135, 0.0
        %v1185 = vunpack.c.l.s4 1934713408
        %v1186 = vunpack.c.0.s8 %v1185
        %v1187 = vlaneseq
        %v1188 = vshrl.u32 %v1187, 7
        %v1189 = vsub.s32 %v1186, %v1188
        %v1190 = vrot.slane %v1135, %v1189
        %v1192 = vunpack.c.l.s4 1934713408
        %v1193 = vunpack.c.0.s8 %v1192
        %v1194 = vlaneseq
        %v1195 = vshrl.u32 %v1194, 7
        %v1196 = vsub.s32 %v1193, %v1195
        %v1197 = vrot.slane %v1183, %v1196
        %v1198 = vcombine.low %v1144, %v1175
        %v1199 = vcombine.high %v1144, %v1175
        %v1200 = vcombine.low %v1151, %v1182
        %v1201 = vcombine.high %v1151, %v1182
        %v1202 = vcombine.low %v1160, %v1190
        %v1203 = vcombine.high %v1160, %v1190
        %v1204 = vcombine.low %v1167, %v1197
        %v1205 = vcombine.high %v1167, %v1197
        %v1206 = vcombine.low %v1081, %v1083
        %v1207 = vcombine.high %v1081, %v1083
        %v1209 = vunpack.c.l.s4 1983009808
        %v1210 = vunpack.c.0.s8 %v1209
        %v1211 = vlaneseq
        %v1212 = vshrl.u32 %v1211, 7
        %v1213 = vsub.s32 %v1210, %v1212
        %v1214 = vrot.slane %v1206, %v1213
        %v1216 = vunpack.c.l.s4 1983009808
        %v1217 = vunpack.c.0.s8 %v1216
        %v1218 = vlaneseq
        %v1219 = vshrl.u32 %v1218, 7
        %v1220 = vsub.s32 %v1217, %v1219
        %v1221 = vrot.slane %v1207, %v1220
        %v1222 = vcombine.low %v1082, %v1084
        %v1223 = vcombine.high %v1082, %v1084
        %v1225 = vunpack.c.l.s4 1983009808
        %v1226 = vunpack.c.0.s8 %v1225
        %v1227 = vlaneseq
        %v1228 = vshrl.u32 %v1227, 7
        %v1229 = vsub.s32 %v1226, %v1228
        %v1230 = vrot.slane %v1222, %v1229
        %v1232 = vunpack.c.l.s4 1983009808
        %v1233 = vunpack.c.0.s8 %v1232
        %v1234 = vlaneseq
        %v1235 = vshrl.u32 %v1234, 7
        %v1236 = vsub.s32 %v1233, %v1235
        %v1237 = vrot.slane %v1223, %v1236
        %v1238 = vcombine.low %v1085, %v1087
        %v1239 = vcombine.high %v1085, %v1087
        %v1241 = vunpack.c.l.s4 1983009808
        %v1242 = vunpack.c.0.s8 %v1241
        %v1243 = vlaneseq
        %v1244 = vshrl.u32 %v1243, 7
        %v1245 = vsub.s32 %v1242, %v1244
        %v1246 = vrot.slane %v1238, %v1245
        %v1248 = vunpack.c.l.s4 1983009808
        %v1249 = vunpack.c.0.s8 %v1248
        %v1250 = vlaneseq
        %v1251 = vshrl.u32 %v1250, 7
        %v1252 = vsub.s32 %v1249, %v1251
        %v1253 = vrot.slane %v1239, %v1252
        %v1254 = vcombine.low %v1086, %v1088
        %v1255 = vcombine.high %v1086, %v1088
        %v1257 = vunpack.c.l.s4 1983009808
        %v1258 = vunpack.c.0.s8 %v1257
        %v1259 = vlaneseq
        %v1260 = vshrl.u32 %v1259, 7
        %v1261 = vsub.s32 %v1258, %v1260
        %v1262 = vrot.slane %v1254, %v1261
        %v1264 = vunpack.c.l.s4 1983009808
        %v1265 = vunpack.c.0.s8 %v1264
        %v1266 = vlaneseq
        %v1267 = vshrl.u32 %v1266, 7
        %v1268 = vsub.s32 %v1265, %v1267
        %v1269 = vrot.slane %v1255, %v1268
        %v1270 = vcombine.low %v1214, %v1230
        %v1271 = vcombine.high %v1214, %v1230
        %v1273 = vunpack.c.l.s4 1934713408
        %v1274 = vunpack.c.0.s8 %v1273
        %v1275 = vlaneseq
        %v1276 = vshrl.u32 %v1275, 7
        %v1277 = vsub.s32 %v1274, %v1276
        %v1278 = vrot.slane %v1270, %v1277
        %v1280 = vunpack.c.l.s4 1934713408
        %v1281 = vunpack.c.0.s8 %v1280
        %v1282 = vlaneseq
        %v1283 = vshrl.u32 %v1282, 7
        %v1284 = vsub.s32 %v1281, %v1283
        %v1285 = vrot.slane %v1271, %v1284
        %v1286 = vcombine.low %v1221, %v1237
        %v1288 = vunpack.c.l.s4 1934713408
        %v1289 = vunpack.c.0.s8 %v1288
        %v1290 = vlaneseq
        %v1291 = vshrl.u32 %v1290, 7
        %v1292 = vsub.s32 %v1289, %v1291
        %v1293 = vrot.slane %v1286, %v1292
        %v1294 = vcombine.low %v1246, %v1262
        %v1295 = vcombine.high %v1246, %v1262
        %v1297 = vunpack.c.l.s4 1934713408
        %v1298 = vunpack.c.0.s8 %v1297
        %v1299 = vlaneseq
        %v1300 = vshrl.u32 %v1299, 7
        %v1301 = vsub.s32 %v1298, %v1300
        %v1302 = vrot.slane %v1294, %v1301
        %v1304 = vunpack.c.l.s4 1934713408
        %v1305 = vunpack.c.0.s8 %v1304
        %v1306 = vlaneseq
        %v1307 = vshrl.u32 %v1306, 7
        %v1308 = vsub.s32 %v1305, %v1307
        %v1309 = vrot.slane %v1295, %v1308
        %v1310 = vcombine.low %v1253, %v1269
        %v1312 = vunpack.c.l.s4 1934713408
        %v1313 = vunpack.c.0.s8 %v1312
        %v1314 = vlaneseq
        %v1315 = vshrl.u32 %v1314, 7
        %v1316 = vsub.s32 %v1313, %v1315
        %v1317 = vrot.slane %v1310, %v1316
        %v1318 = vcombine.low %v1278, %v1302
        %v1319 = vcombine.high %v1278, %v1302
        %v1320 = vcombine.low %v1285, %v1309
        %v1321 = vcombine.high %v1285, %v1309
        %v1322 = vcombine.low %v1293, %v1317
        %v1323 = vcombine.low %v1198, %v1200
        %v1324 = vcombine.high %v1198, %v1200
        %v1326 = vunpack.c.l.s4 1983009808
        %v1327 = vunpack.c.0.s8 %v1326
        %v1328 = vlaneseq
        %v1329 = vshrl.u32 %v1328, 7
        %v1330 = vsub.s32 %v1327, %v1329
        %v1331 = vrot.slane %v1323, %v1330
        %v1333 = vunpack.c.l.s4 1983009808
        %v1334 = vunpack.c.0.s8 %v1333
        %v1335 = vlaneseq
        %v1336 = vshrl.u32 %v1335, 7
        %v1337 = vsub.s32 %v1334, %v1336
        %v1338 = vrot.slane %v1324, %v1337
        %v1339 = vcombine.low %v1199, %v1201
        %v1340 = vcombine.high %v1199, %v1201
        %v1342 = vunpack.c.l.s4 1983009808
        %v1343 = vunpack.c.0.s8 %v1342
        %v1344 = vlaneseq
        %v1345 = vshrl.u32 %v1344, 7
        %v1346 = vsub.s32 %v1343, %v1345
        %v1347 = vrot.slane %v1339, %v1346
        %v1349 = vunpack.c.l.s4 1983009808
        %v1350 = vunpack.c.0.s8 %v1349
        %v1351 = vlaneseq
        %v1352 = vshrl.u32 %v1351, 7
        %v1353 = vsub.s32 %v1350, %v1352
        %v1354 = vrot.slane %v1340, %v1353
        %v1355 = vcombine.low %v1202, %v1204
        %v1356 = vcombine.high %v1202, %v1204
        %v1358 = vunpack.c.l.s4 1983009808
        %v1359 = vunpack.c.0.s8 %v1358
        %v1360 = vlaneseq
        %v1361 = vshrl.u32 %v1360, 7
        %v1362 = vsub.s32 %v1359, %v1361
        %v1363 = vrot.slane %v1355, %v1362
        %v1365 = vunpack.c.l.s4 1983009808
        %v1366 = vunpack.c.0.s8 %v1365
        %v1367 = vlaneseq
        %v1368 = vshrl.u32 %v1367, 7
        %v1369 = vsub.s32 %v1366, %v1368
        %v1370 = vrot.slane %v1356, %v1369
        %v1371 = vcombine.low %v1203, %v1205
        %v1372 = vcombine.high %v1203, %v1205
        %v1374 = vunpack.c.l.s4 1983009808
        %v1375 = vunpack.c.0.s8 %v1374
        %v1376 = vlaneseq
        %v1377 = vshrl.u32 %v1376, 7
        %v1378 = vsub.s32 %v1375, %v1377
        %v1379 = vrot.slane %v1371, %v1378
        %v1381 = vunpack.c.l.s4 1983009808
        %v1382 = vunpack.c.0.s8 %v1381
        %v1383 = vlaneseq
        %v1384 = vshrl.u32 %v1383, 7
        %v1385 = vsub.s32 %v1382, %v1384
        %v1386 = vrot.slane %v1372, %v1385
        %v1387 = vcombine.low %v1331, %v1347
        %v1388 = vcombine.high %v1331, %v1347
        %v1390 = vunpack.c.l.s4 1934713408
        %v1391 = vunpack.c.0.s8 %v1390
        %v1392 = vlaneseq
        %v1393 = vshrl.u32 %v1392, 7
        %v1394 = vsub.s32 %v1391, %v1393
        %v1395 = vrot.slane %v1387, %v1394
        %v1397 = vunpack.c.l.s4 1934713408
        %v1398 = vunpack.c.0.s8 %v1397
        %v1399 = vlaneseq
        %v1400 = vshrl.u32 %v1399, 7
        %v1401 = vsub.s32 %v1398, %v1400
        %v1402 = vrot.slane %v1388, %v1401
        %v1403 = vcombine.low %v1338, %v1354
        %v1405 = vunpack.c.l.s4 1934713408
        %v1406 = vunpack.c.0.s8 %v1405
        %v1407 = vlaneseq
        %v1408 = vshrl.u32 %v1407, 7
        %v1409 = vsub.s32 %v1406, %v1408
        %v1410 = vrot.slane %v1403, %v1409
        %v1411 = vcombine.low %v1363, %v1379
        %v1412 = vcombine.high %v1363, %v1379
        %v1414 = vunpack.c.l.s4 1934713408
        %v1415 = vunpack.c.0.s8 %v1414
        %v1416 = vlaneseq
        %v1417 = vshrl.u32 %v1416, 7
        %v1418 = vsub.s32 %v1415, %v1417
        %v1419 = vrot.slane %v1411, %v1418
        %v1421 = vunpack.c.l.s4 1934713408
        %v1422 = vunpack.c.0.s8 %v1421
        %v1423 = vlaneseq
        %v1424 = vshrl.u32 %v1423, 7
        %v1425 = vsub.s32 %v1422, %v1424
        %v1426 = vrot.slane %v1412, %v1425
        %v1427 = vcombine.low %v1370, %v1386
        %v1429 = vunpack.c.l.s4 1934713408
        %v1430 = vunpack.c.0.s8 %v1429
        %v1431 = vlaneseq
        %v1432 = vshrl.u32 %v1431, 7
        %v1433 = vsub.s32 %v1430, %v1432
        %v1434 = vrot.slane %v1427, %v1433
        %v1435 = vcombine.low %v1395, %v1419
        %v1436 = vcombine.high %v1395, %v1419
        %v1437 = vcombine.low %v1402, %v1426
        %v1438 = vcombine.high %v1402, %v1426
        %v1439 = vcombine.low %v1410, %v1434
        %v1440 = vpack.c.bf16 %v1435, %v1318
        %v1441 = vpack.c.bf16 %v1436, %v1319
        %v1442 = vpack.c.bf16 %v1437, %v1320
        %v1443 = vpack.c.bf16 %v1438, %v1321
        %v1444 = vpack.c.bf16 %v1439, %v1322
        %v1445 = vld [vmem:[#allocation14] sm:$0x3]
        %v1447 = vsel %vm897, %v1440, 0
        %v1450 = vsel %vm897, %v1441, 0
        %v1453 = vsel %vm897, %v1442, 0
        %v1456 = vsel %vm897, %v1443, 0
        %v1459 = vsel %vm897, %v1444, 0
        %v1462 = vsel %vm901, %v1445, 0
        %1464 = vmatprep.subr.bf16.mxu0 0
        %1465 = vmatpush1.bf16.msra.mxu0 %v1462
        %1466 = vmatprep.subr.bf16.mxu0 0
        %1467 = vmatpush1.bf16.msra.mxu0 0
        %1468 = vmatprep.subr.bf16.mxu0 0
        %1469 = vmatpush1.bf16.msra.mxu0 0
        %1470 = vmatprep.subr.bf16.mxu0 0
        %1471 = vmatpush1.bf16.msra.mxu0 0
        %1472 = vmatprep.subr.bf16.mxu0 0
        %1473 = vmatpush1.bf16.msra.mxu0 0
        %1474 = vmatprep.subr.bf16.mxu0 0
        %1475 = vmatpush1.bf16.msra.mxu0 0
        %1476 = vmatprep.subr.bf16.mxu0 0
        %1477 = vmatpush1.bf16.msra.mxu0 0
        %1478 = vmatprep.subr.bf16.mxu0 0
        %1479 = vmatpush1.bf16.msra.mxu0 0
        %1480 = vmatprep.subr.bf16.mxu0 0
        %1481 = vmatpush1.bf16.msra.mxu0 0
        %1482 = vmatprep.subr.bf16.mxu0 0
        %1483 = vmatpush1.bf16.msra.mxu0 0
        %1484 = vmatprep.subr.bf16.mxu0 0
        %1485 = vmatpush1.bf16.msra.mxu0 0
        %1486 = vmatprep.subr.bf16.mxu0 0
        %1487 = vmatpush1.bf16.msra.mxu0 0
        %1488 = vmatprep.subr.bf16.mxu0 0
        %1489 = vmatpush1.bf16.msra.mxu0 0
        %1490 = vmatprep.subr.bf16.mxu0 0
        %1491 = vmatpush1.bf16.msra.mxu0 0
        %1492 = vmatprep.subr.bf16.mxu0 0
        %1493 = vmatpush1.bf16.msra.mxu0 0
        %1494 = vmatprep.subr.bf16.mxu0 0
        %1495 = vmatpush1.bf16.msra.mxu0 0
        %1496 = vmatprep.mubr.bf16.mxu0 0
        %1497 = vmatmul.mubr.bf16.gmra.mrb[0].mxu0 %v1447
        %v1498 = vpop.f32.mrb[0].mxu0
        %v1499 = vadd.f32 0.0, %v1498
        %v1500 = vpop.f32.mrb[0].mxu0
        %v1501 = vpop.f32.mrb[0].mxu0
        %v1502 = vadd.f32 0.0, %v1501
        %v1503 = vpop.f32.mrb[0].mxu0
        %1504 = vmatprep.mubr.bf16.mxu0 0
        %1505 = vmatmul.mubr.bf16.gmra.mrb[0].mxu0 %v1450
        %v1506 = vpop.f32.mrb[0].mxu0
        %v1507 = vadd.f32 0.0, %v1506
        %v1508 = vpop.f32.mrb[0].mxu0
        %v1509 = vpop.f32.mrb[0].mxu0
        %v1510 = vadd.f32 0.0, %v1509
        %v1511 = vpop.f32.mrb[0].mxu0
        %1512 = vmatprep.mubr.bf16.mxu0 0
        %1513 = vmatmul.mubr.bf16.gmra.mrb[0].mxu0 %v1453
        %v1514 = vpop.f32.mrb[0].mxu0
        %v1515 = vadd.f32 0.0, %v1514
        %v1516 = vpop.f32.mrb[0].mxu0
        %v1517 = vpop.f32.mrb[0].mxu0
        %v1518 = vadd.f32 0.0, %v1517
        %v1519 = vpop.f32.mrb[0].mxu0
        %1520 = vmatprep.mubr.bf16.mxu0 0
        %1521 = vmatmul.mubr.bf16.gmra.mrb[0].mxu0 %v1456
        %v1522 = vpop.f32.mrb[0].mxu0
        %v1523 = vadd.f32 0.0, %v1522
        %v1524 = vpop.f32.mrb[0].mxu0
        %v1525 = vpop.f32.mrb[0].mxu0
        %v1526 = vadd.f32 0.0, %v1525
        %v1527 = vpop.f32.mrb[0].mxu0
        %1528 = vmatprep.mubr.bf16.mxu0 0
        %1529 = vmatmul.mubr.bf16.gmra.mrb[0].mxu0 %v1459
        %v1530 = vpop.f32.mrb[0].mxu0
        %v1531 = vadd.f32 0.0, %v1530
        %v1532 = vpop.f32.mrb[0].mxu0
        %v1533 = vpop.f32.mrb[0].mxu0
        %v1534 = vadd.f32 0.0, %v1533
        %v1535 = vpop.f32.mrb[0].mxu0
        %1536 = vdwg.mxu0
        %vm1537 = vcmask 261120
        %v1538 = vsel %vm1537, %v1499, -inf
        %v1539 = vsel %vm1537, %v1507, -inf
        %v1540 = vsel %vm1537, %v1515, -inf
        %v1541 = vmax.f32 %v1538, %v1540
        %v1542 = vsel %vm1537, %v1523, -inf
        %v1543 = vmax.f32 %v1539, %v1542
        %v1544 = vsel %vm1537, %v1531, -inf
        %v1545 = vmax.f32 %v1541, %v1544
        %v1546 = vmax.f32 %v1545, %v1543
        %v1547 = vsel %vm1537, %v1502, -inf
        %v1548 = vsel %vm1537, %v1510, -inf
        %v1549 = vsel %vm1537, %v1518, -inf
        %v1550 = vmax.f32 %v1547, %v1549
        %v1551 = vsel %vm1537, %v1526, -inf
        %v1552 = vmax.f32 %v1548, %v1551
        %v1553 = vsel %vm1537, %v1534, -inf
        %v1554 = vmax.f32 %v1550, %v1553
        %v1555 = vmax.f32 %v1554, %v1552
        %v1556 = vsub.f32 %v1499, %v1546
        %v1557 = vsub.f32 %v1502, %v1555
        %v1558 = vsub.f32 %v1507, %v1546
        %v1559 = vsub.f32 %v1510, %v1555
        %v1560 = vsub.f32 %v1515, %v1546
        %v1561 = vsub.f32 %v1518, %v1555
        %v1562 = vsub.f32 %v1523, %v1546
        %v1563 = vsub.f32 %v1526, %v1555
        %v1564 = vsub.f32 %v1531, %v1546
        %v1565 = vsub.f32 %v1534, %v1555
        %v1566 = vmul.f32 %v1556, 1.442695
        %v1567 = vpow.pop %v1566
        %v1568 = vmul.f32 %v1557, 1.442695
        %v1569 = vpow.pop %v1568
        %v1570 = vmul.f32 %v1558, 1.442695
        %v1571 = vpow.pop %v1570
        %v1572 = vmul.f32 %v1559, 1.442695
        %v1573 = vpow.pop %v1572
        %v1574 = vmul.f32 %v1560, 1.442695
        %v1575 = vpow.pop %v1574
        %v1576 = vmul.f32 %v1561, 1.442695
        %v1577 = vpow.pop %v1576
        %v1578 = vmul.f32 %v1562, 1.442695
        %v1579 = vpow.pop %v1578
        %v1580 = vmul.f32 %v1563, 1.442695
        %v1581 = vpow.pop %v1580
        %v1582 = vmul.f32 %v1564, 1.442695
        %v1583 = vpow.pop %v1582
        %v1584 = vmul.f32 %v1565, 1.442695
        %v1585 = vpow.pop %v1584
        %v1586 = vsel %vm1537, %v1567, 0.0
        %v1587 = vsel %vm1537, %v1571, 0.0
        %v1588 = vadd.f32 %v1586, %v1587
        %v1589 = vsel %vm1537, %v1575, 0.0
        %v1590 = vadd.f32 %v1588, %v1589
        %v1591 = vsel %vm1537, %v1579, 0.0
        %v1592 = vadd.f32 %v1590, %v1591
        %v1593 = vsel %vm1537, %v1583, 0.0
        %v1594 = vadd.f32 %v1592, %v1593
        %v1595 = vsel %vm1537, %v1569, 0.0
        %v1596 = vsel %vm1537, %v1573, 0.0
        %v1597 = vadd.f32 %v1595, %v1596
        %v1598 = vsel %vm1537, %v1577, 0.0
        %v1599 = vadd.f32 %v1597, %v1598
        %v1600 = vsel %vm1537, %v1581, 0.0
        %v1601 = vadd.f32 %v1599, %v1600
        %v1602 = vsel %vm1537, %v1585, 0.0
        %v1603 = vadd.f32 %v1601, %v1602
        %v1604 = vlog2.pop %v1594
        %v1605 = vmul.f32 %v1604, 0.6931472
        %v1606 = vlog2.pop %v1603
        %v1607 = vmul.f32 %v1606, 0.6931472
        %v1608 = vsub.f32 %v1556, %v1605
        %v1609 = vsub.f32 %v1557, %v1607
        %v1610 = vsub.f32 %v1558, %v1605
        %v1611 = vsub.f32 %v1559, %v1607
        %v1612 = vsub.f32 %v1560, %v1605
        %v1613 = vsub.f32 %v1561, %v1607
        %v1614 = vsub.f32 %v1562, %v1605
        %v1615 = vsub.f32 %v1563, %v1607
        %v1616 = vsub.f32 %v1564, %v1605
        %v1617 = vsub.f32 %v1565, %v1607
        %v1618 = vpack.c.bf16 %v1609, %v1608
        %v1619 = vpack.c.bf16 %v1611, %v1610
        %v1620 = vpack.c.bf16 %v1613, %v1612
        %v1621 = vpack.c.bf16 %v1615, %v1614
        %v1622 = vpack.c.bf16 %v1617, %v1616
        %v1628 = vunpack.c.l.b16 %v1618
        %v1629 = vunpack.c.h.b16 %v1618
        %v1630 = vunpack.c.l.b16 %v1619
        %v1631 = vunpack.c.h.b16 %v1619
        %v1632 = vunpack.c.l.b16 %v1620
        %v1633 = vunpack.c.h.b16 %v1620
        %v1634 = vunpack.c.l.b16 %v1621
        %v1635 = vunpack.c.h.b16 %v1621
        %v1636 = vunpack.c.l.b16 %v1622
        %v1637 = vunpack.c.h.b16 %v1622
        %v1638 = vpack.c.b16 %v1628, %v1628
        %v1639 = vpack.c.b16 %v1629, %v1629
        %v1640 = vpack.c.b16 %v1630, %v1630
        %v1641 = vpack.c.b16 %v1631, %v1631
        %v1642 = vpack.c.b16 %v1632, %v1632
        %v1643 = vpack.c.b16 %v1633, %v1633
        %v1644 = vpack.c.b16 %v1634, %v1634
        %v1645 = vpack.c.b16 %v1635, %v1635
        %v1646 = vpack.c.b16 %v1636, %v1636
        %v1647 = vpack.c.b16 %v1637, %v1637
        %vm1658 = vcmask 257024
        %1659 = vst.msk [vmem:[%s445] sm:$0xf] %vm1658, %v1638
        %1660 = vst.msk [vmem:[%s445 + $0x4] sm:$0xf] %vm1658, %v1639
        %1661 = vst.msk [vmem:[%s445 + $0x8] sm:$0xf] %vm1658, %v1640
        %1662 = vst.msk [vmem:[%s445 + $0xc] sm:$0xf] %vm1658, %v1641
        %1663 = vst.msk [vmem:[%s445 + $0x10] sm:$0xf] %vm1658, %v1642
        %1664 = vst.msk [vmem:[%s445 + $0x14] sm:$0xf] %vm1658, %v1643
        %1665 = vst.msk [vmem:[%s445 + $0x18] sm:$0xf] %vm1658, %v1644
        %1666 = vst.msk [vmem:[%s445 + $0x1c] sm:$0xf] %vm1658, %v1645
        %1667 = vst.msk [vmem:[%s445 + $0x20] sm:$0xf] %vm1658, %v1646
        %1668 = vst.msk [vmem:[%s445 + $0x24] sm:$0xf] %vm1658, %v1647
        %s1669 = sand.u32 %s213, 1
        %s1670 = scalar_lea.sflag [#allocation5], %s1669
        %s1671 = sand.u32 %s213, 1
        %s1672 = smul.addr %s1671, 40
        %s1673 = scalar_lea.vmem [#allocation15], %s1672
        %s1674 = sand.u32 %s239, 1
        %s1675 = scalar_lea.sflag [#allocation17], %s1674
        %s1676 = sand.u32 %s239, 1
        %s1677 = smul.addr %s1676, 8
        %s1678 = scalar_lea.vmem [#allocation16], %s1677
        // Predicated region
        $region81: #{drn_seg_forward.1} parent=47 // pred_check
          %p1679 = pneg %p223
        $region82: #{drn_seg_forward.1} parent=47 // pred_check_branch
          %1681 = sbr.rel (%p1679) target = $region84
        $region83: #{drn_seg_forward.1} parent=47 // pred_region
          #allocation19 [shape = 'u32[6]{0}', space=smem, size = 0x18, scoped, tag = 'DMA stride descriptor']
          %s1682 = smul.u32 2, %s39
          %s1684 = ssub.s32 640, 640
          %1685 = vsyncadd %s1670, %s1684
          %s1686 = smul.addr %s38, 20
          %s1687 = sadd.s32 %s1682, %s1686
          %s1688 = smul.addr %s1687, 64
          %s1689 = scalar_lea.hbm %s7, %s1688
          %s1691 = sshll.u32 1, 14
          %s1692 = sxor.u32 4294967295, %s1691
          %s1695 = sshll.u32 7, 18
          %s1696 = sxor.u32 4294967295, %s1695
          %s1697 = sand.u32 0, %s1696
          %s1699 = sor.u32 %s1697, 0
          %s1701 = sshll.u32 3, 24
          %s1702 = sxor.u32 4294967295, %s1701
          %s1703 = sand.u32 %s1699, %s1702
          %s1705 = sor.u32 %s1703, 0
          %s1706 = sshll.u32 %s1673, 4
          %s1707 = int_to_ptr.vmem [resolvable:$true] %s1706
          %1713 = sst [smem:[#allocation19]] 128
          %s1714 = scalar_lea.smem [#allocation19], 1
          %1715 = sst [smem:[%s1714]] 256
          %s1716 = scalar_lea.smem [#allocation19], 2
          %1717 = sst [smem:[%s1716]] 2
          %s1718 = scalar_lea.smem [#allocation19], 3
          %1719 = sst [smem:[%s1718]] 64
          %s1720 = scalar_lea.smem [#allocation19], 4
          %1721 = sst [smem:[%s1720]] 64
          %s1722 = scalar_lea.smem [#allocation19], 5
          %1723 = sst [smem:[%s1722]] 4
          %1725 = dma.general %s1707, 640, %s1689, %s1670, [#allocation18], [#allocation19], %s1705, 0
        $region84: #{drn_seg_forward.1} parent=47 // pred_fallthru
          _
        // Predicated region
        $region85: #{drn_seg_forward.1} parent=47 // pred_check
          %p1726 = pneg %p249
        $region86: #{drn_seg_forward.1} parent=47 // pred_check_branch
          %1728 = sbr.rel (%p1726) target = $region88
        $region87: #{drn_seg_forward.1} parent=47 // pred_region
          %s1730 = ssub.s32 128, 128
          %1731 = vsyncadd %s1675, %s1730
          %s1732 = smul.addr %s38, 128
          %s1733 = scalar_lea.hbm %s8, %s1732
          %s1735 = sshll.u32 %s1678, 4
          %s1736 = int_to_ptr.vmem [resolvable:$true] %s1735
          %1738 = dma.vmem_to_hbm [thread:$0]  %s1736, 128, %s1733, %s1675
        $region88: #{drn_seg_forward.1} parent=47 // pred_fallthru
          _
      $region48: #{drn_seg_forward.1} parent=5 // pred_fallthru
        _
      %p1739 = scmp.le.s32.totalorder 2, %s29
      // Predicated region
      $region89: #{drn_seg_forward.1} parent=5 // pred_check
        %p1740 = pneg %p1739
      $region90: #{drn_seg_forward.1} parent=5 // pred_check_branch
        %1742 = sbr.rel (%p1740) target = $region92
      $region91: #{drn_seg_forward.1} parent=5 // pred_region
        %s1743 = ssub.s32 %s29, 2
        // Predicated region
        $region93: #{drn_seg_forward.1} parent=91 // pred_check
          %p1744 = pneg %p229
        $region94: #{drn_seg_forward.1} parent=91 // pred_check_branch
          %1746 = sbr.rel (%p1744) target = $region96
        $region95: #{drn_seg_forward.1} parent=91 // pred_region
          %s1747 = sand.u32 %s214, 1
          %s1748 = scalar_lea.sflag [#allocation5], %s1747
          %s1749 = sand.u32 %s214, 1
          %s1750 = smul.addr %s1749, 40
          %s1751 = scalar_lea.vmem [#allocation15], %s1750
          %1752 = dma.done %s1748, 640
        $region96: #{drn_seg_forward.1} parent=91 // pred_fallthru
          _
        // Predicated region
        $region97: #{drn_seg_forward.1} parent=91 // pred_check
          %p1753 = pneg %p255
        $region98: #{drn_seg_forward.1} parent=91 // pred_check_branch
          %1755 = sbr.rel (%p1753) target = $region100
        $region99: #{drn_seg_forward.1} parent=91 // pred_region
          %s1756 = sand.u32 %s240, 1
          %s1757 = scalar_lea.sflag [#allocation17], %s1756
          %s1758 = sand.u32 %s240, 1
          %s1759 = smul.addr %s1758, 8
          %s1760 = scalar_lea.vmem [#allocation16], %s1759
          %1761 = dma.done %s1757, 128
        $region100: #{drn_seg_forward.1} parent=91 // pred_fallthru
          _
      $region92: #{drn_seg_forward.1} parent=5 // pred_fallthru
        _
    $region6: #{drn_seg_forward.1} parent=1 // loop_footer
      %s33 = sadd.s32 1, %s29
    $region7: #{drn_seg_forward.1} parent=1 // loop_footer_branch
      %28 = sbr.rel target = $region3
    $region8: #{drn_seg_forward.1} parent=1 // loop_exit
      _
    %1762 = vsyncpa [#allocation4], 1
    %s1763 = scalar_lea.sflag [#allocation4], 1
    %1764 = vsyncpa %s1763, 1
    %1765 = vsyncpa [#allocation7], 1
    %1766 = vsyncpa [#allocation10], 1
    %1767 = vsyncpa [#allocation13], 1
    %s1768 = scalar_lea.sflag [#allocation13], 1
    %1769 = vsyncpa %s1768, 1
    %1770 = vsyncpa [#allocation5], 1
    %s1771 = scalar_lea.sflag [#allocation5], 1
    %1772 = vsyncpa %s1771, 1
    %1773 = vsyncpa [#allocation17], 1
    %s1774 = scalar_lea.sflag [#allocation17], 1
    %1775 = vsyncpa %s1774, 1

</llo_original>
